<compile_context>
chip_gen: v7x
topology: tpu7x:2x2x1
jax: 0.10.0
libtpu: 0.0.40
codegen_flags: <defaults>
</compile_context>

<pallas_src>
import functools

import jax
import jax.numpy as jnp
from jax.experimental import pallas as pl
from jax.experimental.pallas import tpu as pltpu


def _round_up(a, b):
    return (a + b - 1) // b * b


def choose_tiling(num_nodes, batch=1):
    """Pick (TILE, Np) with Np % TILE == 0.

    Small graphs: one tile per graph (the batch axis still provides >=2 parallel
    work items for v7x megacore when batch >= 2; for batch == 1 we split the node
    axis in two when it stays 128-aligned).  Large graphs: 512-1024 tiles to
    amortize per-grid-step overhead while fitting a v7x 64 MiB VMEM budget.
    """
    n128 = _round_up(num_nodes, 128)
    if n128 <= 1024:
        if batch == 1 and n128 >= 256 and (n128 // 2) % 128 == 0:
            tile = n128 // 2
            return tile, n128
        return n128, n128
    best_t, best_np = 1024, _round_up(num_nodes, 1024)
    for t in range(896, 511, -128):
        np_ = _round_up(num_nodes, t)
        if np_ < best_np:
            best_t, best_np = t, np_
    return best_t, best_np


def prepare_ggru_weights(params, in_channels):
    """Fold basis-decomposed RGCN weights, root projections and GRU biases into the
    fused layouts consumed by the kernel.  Call ONCE per cell (weights are constant
    across timesteps), not per forward step."""
    C = params["bias_r"].shape[-1]
    Cin = in_channels
    GW = 3 * C                      # raw gi / gh width
    GWp = _round_up(GW, 128)        # lane-aligned half width
    Wp = 2 * GWp                    # fused [gi | gh] width
    Cf = C + Cin                    # fused [h | x] feature width

    wi_rel = jnp.einsum("rb,bio->rio", params["att_i"], params["basis_i"])  # (R, Cin, 3C)
    wh_rel = jnp.einsum("rb,bio->rio", params["att_h"], params["basis_h"])  # (R, C, 3C)
    R = wi_rel.shape[0]

    # Block-diagonal fused relation weight: [h | x] @ wf[r] = [x@Wi[r] | h@Wh[r]]
    # (h rows feed the gh half, x rows feed the gi half).
    wf = jnp.zeros((R, Cf, Wp), jnp.float32)
    wf = wf.at[:, C:C + Cin, 0:GW].set(wi_rel)
    wf = wf.at[:, 0:C, GWp:GWp + GW].set(wh_rel)

    # Fused root weight for the accumulator seed.
    wroot = jnp.zeros((Cf, Wp), jnp.float32)
    wroot = wroot.at[C:C + Cin, 0:GW].set(params["root_i"].astype(jnp.float32))
    wroot = wroot.at[0:C, GWp:GWp + GW].set(params["root_h"].astype(jnp.float32))

    # The three GRU biases live in the gi half of the accumulator seed.
    bias_cat = jnp.concatenate(
        [params["bias_r"], params["bias_i"], params["bias_n"]]).astype(jnp.float32)
    bias = jnp.zeros((1, Wp), jnp.float32).at[0, 0:GW].set(bias_cat)

    return dict(wf=wf, wroot=wroot, bias=bias,
                C=C, Cin=Cin, Cf=Cf, GWp=GWp, Wp=Wp, R=R)


def pad_adjacency(adj_graph, num_nodes, batch=1):
    """Pad the per-graph dense adjacency (R, nodes, nodes) to (R, Np, Np) bf16.

    Hoist this OUT of the recurrent loop: the graph is fixed across timesteps, so
    the padded/cast copy is built once and reused by every GGRU step.
    bf16 is exact for integer edge multiplicities up to 256 (PVCGN multigraphs use
    small multiplicities); add a host-side check here if that assumption can break.
    """
    _, np_pad = choose_tiling(num_nodes, batch)
    R = adj_graph.shape[0]
    adj_pad = jnp.zeros((R, np_pad, np_pad), jnp.float32)
    adj_pad = adj_pad.at[:, :num_nodes, :num_nodes].set(adj_graph.astype(jnp.float32))
    return adj_pad.astype(jnp.bfloat16)


def ggru_cell_kernel(xh_dst_ref, xh_src_ref, adj_ref, wf_ref, wroot_ref, bias_ref,
                     out_ref, acc_ref, *, C, GWp):
    r = pl.program_id(2)
    k = pl.program_id(3)

    # Seed the accumulator with the RGCN root projections + fused GRU biases on the
    # first reduction step of each (batch, dst-row) tile.
    @pl.when((r == 0) & (k == 0))
    def _():
        acc_ref[...] = (
            jnp.dot(xh_dst_ref[0], wroot_ref[...], preferred_element_type=jnp.float32)
            + bias_ref[...])

    # Recompute the fused per-relation message RHS for this src tile on the fly:
    #   P = [x_src @ Wi[r] | h_src @ Wh[r]]   (skinny f32 matmul over C+Cin)
    p = jnp.dot(xh_src_ref[0], wf_ref[0], preferred_element_type=jnp.float32)
    # One wide bf16 MXU pass per adjacency tile feeds both gate streams:
    #   acc += A[r, dst_tile, src_tile] @ P
    acc_ref[...] += jnp.dot(adj_ref[0], p.astype(jnp.bfloat16),
                            preferred_element_type=jnp.float32)

    # GRU epilogue on the last reduction step (slices the accumulator ref directly).
    @pl.when((r == pl.num_programs(2) - 1) & (k == pl.num_programs(3) - 1))
    def _():
        i_r = acc_ref[:, 0:C]
        i_i = acc_ref[:, C:2 * C]
        i_n = acc_ref[:, 2 * C:3 * C]
        h_r = acc_ref[:, GWp:GWp + C]
        h_i = acc_ref[:, GWp + C:GWp + 2 * C]
        h_n = acc_ref[:, GWp + 2 * C:GWp + 3 * C]
        h = xh_dst_ref[0, :, 0:C]                     # hidden = leading C lanes of [h|x]
        resetgate = jax.nn.sigmoid(i_r + h_r)         # bias_r folded into the seed
        inputgate = jax.nn.sigmoid(i_i + h_i)         # bias_i folded into the seed
        newgate = jnp.tanh(i_n + resetgate * h_n)     # bias_n folded into the seed
        out_ref[0] = (1.0 - inputgate) * newgate + inputgate * h


def ggru_cell_forward(x, hidden, adj_pad, weights, *, batch, num_nodes):
    """x: (batch*num_nodes, Cin), hidden: (batch*num_nodes, C) or None,
    adj_pad: (R, Np, Np) bf16 from pad_adjacency, weights: prepare_ggru_weights()."""
    C, Cin, Cf = weights["C"], weights["Cin"], weights["Cf"]
    GWp, Wp, R = weights["GWp"], weights["Wp"], weights["R"]

    tile, np_pad = choose_tiling(num_nodes, batch)
    assert adj_pad.shape == (R, np_pad, np_pad), "adjacency padded with a different tiling"
    N = batch * num_nodes

    x = x.astype(jnp.float32).reshape(batch, num_nodes, Cin)
    if hidden is None:
        hidden = jnp.zeros((N, C), jnp.float32)
    h = hidden.astype(jnp.float32).reshape(batch, num_nodes, C)

    # Per-step glue is only the cheap [h | x] concat + node padding; the expensive
    # adjacency densify/pad/cast lives in pad_adjacency (hoisted out of the loop).
    xh = jnp.zeros((batch, np_pad, Cf), jnp.float32)
    xh = xh.at[:, :num_nodes, 0:C].set(h)
    xh = xh.at[:, :num_nodes, C:C + Cin].set(x)

    it = np_pad // tile
    kt = np_pad // tile
    grid = (batch, it, R, kt)

    kernel = functools.partial(ggru_cell_kernel, C=C, GWp=GWp)

    cost = pl.CostEstimate(
        flops=(2 * batch * R * np_pad * np_pad * Wp          # adjacency matmuls
               + 2 * batch * it * R * np_pad * Cf * Wp       # in-kernel P recompute
               + 2 * batch * np_pad * Cf * Wp),              # accumulator seed
        transcendentals=3 * batch * np_pad * C,
        bytes_accessed=(2 * batch * R * np_pad * np_pad      # bf16 adjacency (per batch)
                        + 4 * batch * it * R * np_pad * Cf   # f32 xh src re-reads
                        + 4 * batch * np_pad * (Cf + C)      # xh dst + output
                        + 4 * (R + 2) * Cf * Wp),            # fused weights
    )

    # VMEM working set: double-buffered streams + resident weights + accumulator.
    # Budgeted well inside v7x's 64 MiB/TC (and trivially inside v5e/v6e's 128 MiB).
    ws = (2 * tile * tile * 2          # adj (bf16, double-buffered)
          + 4 * tile * Cf * 4          # xh dst + src (f32, double-buffered)
          + tile * Wp * 4              # accumulator scratch
          + 2 * tile * C * 4           # output (double-buffered)
          + 2 * (Cf * Wp * 4 + Cf * Wp * 4 + Wp * 4))   # wf / wroot / bias
    vmem_limit = int(min(48 * 2 ** 20, max(32 * 2 ** 20, 2 * ws)))

    out_pad = pl.pallas_call(
        kernel,
        out_shape=jax.ShapeDtypeStruct((batch, np_pad, C), jnp.float32),
        grid_spec=pltpu.PrefetchScalarGridSpec(
            num_scalar_prefetch=0,
            grid=grid,
            in_specs=[
                pl.BlockSpec((1, tile, Cf), lambda b, i, r, k: (b, i, 0)),    # xh dst rows
                pl.BlockSpec((1, tile, Cf), lambda b, i, r, k: (b, k, 0)),    # xh src rows
                pl.BlockSpec((1, tile, tile), lambda b, i, r, k: (r, i, k)),  # adjacency tile
                pl.BlockSpec((1, Cf, Wp), lambda b, i, r, k: (r, 0, 0)),      # fused rel weight
                pl.BlockSpec((Cf, Wp), lambda b, i, r, k: (0, 0)),            # fused root weight
                pl.BlockSpec((1, Wp), lambda b, i, r, k: (0, 0)),             # fused GRU biases
            ],
            out_specs=pl.BlockSpec((1, tile, C), lambda b, i, r, k: (b, i, 0)),
            scratch_shapes=[pltpu.VMEM((tile, Wp), jnp.float32)],
        ),
        compiler_params=pltpu.CompilerParams(
            dimension_semantics=("parallel", "parallel", "arbitrary", "arbitrary"),
            vmem_limit_bytes=vmem_limit),
        cost_estimate=cost,
    )(xh, xh, adj_pad, weights["wf"], weights["wroot"], weights["bias"])

    next_h = out_pad[:, :num_nodes, :].reshape(N, C)
    # output == next_hidden when dropout_type is None (no duplicate HBM writeback).
    return next_h, next_h


def ggru_cell_reference(x, hidden, adj_full, params):
    """Pure-JAX f32 reference mirroring the PyTorch forward (adj_full: (R, N, N))."""
    N, _ = x.shape
    C = params["bias_r"].shape[-1]
    if hidden is None:
        hidden = jnp.zeros((N, C), dtype=x.dtype)

    def rgcn(xx, att, basis, root):
        w = jnp.einsum("rb,bio->rio", att, basis)
        out = xx @ root
        for r in range(adj_full.shape[0]):
            out = out + adj_full[r] @ (xx @ w[r])
        return out

    gi = rgcn(x, params["att_i"], params["basis_i"], params["root_i"])
    gh = rgcn(hidden, params["att_h"], params["basis_h"], params["root_h"])
    i_r, i_i, i_n = gi[:, :C], gi[:, C:2 * C], gi[:, 2 * C:]
    h_r, h_i, h_n = gh[:, :C], gh[:, C:2 * C], gh[:, 2 * C:]
    resetgate = jax.nn.sigmoid(i_r + h_r + params["bias_r"])
    inputgate = jax.nn.sigmoid(i_i + h_i + params["bias_i"])
    newgate = jnp.tanh(i_n + resetgate * h_n + params["bias_n"])
    next_h = (1.0 - inputgate) * newgate + inputgate * hidden
    return next_h, next_h


if __name__ == "__main__":
    # Small config consistent with the module defaults.
    batch = 2
    num_nodes = 80
    in_channels = 8
    out_channels = 32
    num_relations = 3
    num_bases = 3
    N = batch * num_nodes
    num_edges = 320          # edges of the shared (per-graph) metro multigraph

    key = jax.random.PRNGKey(0)
    keys = jax.random.split(key, 10)

    x = jax.random.normal(keys[0], (N, in_channels), dtype=jnp.float32)
    hidden = jax.random.normal(keys[1], (N, out_channels), dtype=jnp.float32)

    # Random relational graph on `num_nodes` nodes, shared by every batch element
    # (PVCGN batches replicate the same metro graph, so the batched adjacency is
    # block-diagonal; the kernel exploits that structure directly).
    src = jax.random.randint(keys[2], (num_edges,), 0, num_nodes)
    dst = jax.random.randint(keys[3], (num_edges,), 0, num_nodes)
    edge_attr = jax.random.randint(keys[4], (num_edges,), 0, num_relations)
    adj_graph = jnp.zeros((num_relations, num_nodes, num_nodes), dtype=jnp.float32)
    adj_graph = adj_graph.at[edge_attr, dst, src].add(1.0)

    # Block-diagonal full adjacency only for the pure-JAX reference.
    adj_full = jnp.zeros((num_relations, N, N), dtype=jnp.float32)
    for b in range(batch):
        s = b * num_nodes
        adj_full = adj_full.at[:, s:s + num_nodes, s:s + num_nodes].set(adj_graph)

    scale = 0.1
    params = {
        # cheb_i: RGCNConv(in_channels -> 3*out_channels), bias=False
        "basis_i": scale * jax.random.normal(
            keys[5], (num_bases, in_channels, 3 * out_channels), dtype=jnp.float32),
        "att_i": scale * jax.random.normal(
            keys[6], (num_relations, num_bases), dtype=jnp.float32),
        "root_i": scale * jax.random.normal(
            keys[7], (in_channels, 3 * out_channels), dtype=jnp.float32),
        # cheb_h: RGCNConv(out_channels -> 3*out_channels), bias=False
        "basis_h": scale * jax.random.normal(
            keys[8], (num_bases, out_channels, 3 * out_channels), dtype=jnp.float32),
        "att_h": scale * jax.random.normal(
            keys[9], (num_relations, num_bases), dtype=jnp.float32),
        "root_h": scale * jax.random.normal(
            jax.random.PRNGKey(1), (out_channels, 3 * out_channels), dtype=jnp.float32),
        # GRU biases: init.ones_ in reset_parameters()
        "bias_r": jnp.ones((out_channels,), dtype=jnp.float32),
        "bias_i": jnp.ones((out_channels,), dtype=jnp.float32),
        "bias_n": jnp.ones((out_channels,), dtype=jnp.float32),
    }

    # One-time setup (reused across all timesteps of the recurrent cell).
    weights = prepare_ggru_weights(params, in_channels)
    adj_pad = pad_adjacency(adj_graph, num_nodes, batch)

    out, next_h = ggru_cell_forward(x, hidden, adj_pad, weights,
                                    batch=batch, num_nodes=num_nodes)
    out = jax.block_until_ready(out)
    next_h = jax.block_until_ready(next_h)

    ref_out, ref_next = ggru_cell_reference(x, hidden, adj_full, params)
    # Tolerance loosened slightly vs pure-f32: the adjacency matmul operands are
    # bf16 (f32 accumulation); adjacency counts themselves are exact in bf16.
    assert jnp.allclose(out, ref_out, atol=1e-2, rtol=1e-2), "output mismatch"
    assert jnp.allclose(next_h, ref_next, atol=1e-2, rtol=1e-2), "next_hidden mismatch"

    print("KERNEL_OK")
</pallas_src>

<mosaic_0001>
module attributes {stable_mosaic.version = 11 : i64} {
  func.func @ggru_cell_kernel(%arg0: i32, %arg1: i32, %arg2: i32, %arg3: i32, %arg4: memref<1x128x40xf32, #tpu.memory_space<vmem>>, %arg5: memref<1x128x40xf32, #tpu.memory_space<vmem>>, %arg6: memref<1x128x128xbf16, #tpu.memory_space<vmem>>, %arg7: memref<1x40x256xf32, #tpu.memory_space<vmem>>, %arg8: memref<40x256xf32, #tpu.memory_space<vmem>>, %arg9: memref<1x256xf32, #tpu.memory_space<vmem>>, %arg10: memref<1x128x32xf32, #tpu.memory_space<vmem>>, %arg11: memref<128x256xf32, #tpu.memory_space<vmem>>) attributes {dimension_semantics = [#tpu.dimension_semantics<parallel>, #tpu.dimension_semantics<parallel>, #tpu.dimension_semantics<arbitrary>, #tpu.dimension_semantics<arbitrary>], iteration_bounds = array<i64: 2, 1, 3, 1>, scalar_prefetch = 0 : i64, scratch_operands = 1 : i64, tpu.core_type = #tpu.core_type<tc>, window_params = [{transform_indices = @transform_0, window_bounds = array<i64: 1, 128, 40>}, {transform_indices = @transform_1, window_bounds = array<i64: 1, 128, 40>}, {transform_indices = @transform_2, window_bounds = array<i64: 1, 128, 128>}, {transform_indices = @transform_3, window_bounds = array<i64: 1, 40, 256>}, {pipeline_mode = #tpu.pipeline_mode<synchronous>, transform_indices = @transform_4, window_bounds = array<i64: 40, 256>}, {pipeline_mode = #tpu.pipeline_mode<synchronous>, transform_indices = @transform_5, window_bounds = array<i64: 1, 256>}, {transform_indices = @transform_6, window_bounds = array<i64: 1, 128, 32>}]} {
    %c0_i32 = arith.constant 0 : i32
    %0 = arith.cmpi eq, %arg2, %c0_i32 : i32
    %c0_i32_0 = arith.constant 0 : i32
    %1 = arith.cmpi eq, %arg3, %c0_i32_0 : i32
    %2 = arith.andi %0, %1 : i1
    %3 = arith.extui %2 : i1 to i32
    %c0_i32_1 = arith.constant 0 : i32
    %4 = arith.cmpi ne, %3, %c0_i32_1 : i32
    scf.if %4 {
      %c0_17 = arith.constant 0 : index
      %c0_18 = arith.constant 0 : index
      %c0_19 = arith.constant 0 : index
      %22 = vector.load %arg4[%c0_17, %c0_18, %c0_19] : memref<1x128x40xf32, #tpu.memory_space<vmem>>, vector<1x128x40xf32>
      %23 = vector.shape_cast %22 : vector<1x128x40xf32> to vector<128x40xf32>
      %c0_20 = arith.constant 0 : index
      %c0_21 = arith.constant 0 : index
      %24 = vector.load %arg8[%c0_20, %c0_21] : memref<40x256xf32, #tpu.memory_space<vmem>>, vector<40x256xf32>
      %cst_22 = arith.constant dense<0.000000e+00> : vector<128x256xf32>
      %25 = tpu.matmul %23, %24, %cst_22 {dimension_numbers = #tpu.dot_dimension_numbers<[1], [0], [0], [1], [0, 0, 1, 1], [], []>} : vector<128x40xf32>, vector<40x256xf32>, vector<128x256xf32> -> vector<128x256xf32>
      %c0_23 = arith.constant 0 : index
      %c0_24 = arith.constant 0 : index
      %26 = vector.load %arg9[%c0_23, %c0_24] : memref<1x256xf32, #tpu.memory_space<vmem>>, vector<1x256xf32>
      %27 = vector.broadcast %26 : vector<1x256xf32> to vector<128x256xf32>
      %28 = arith.addf %25, %27 : vector<128x256xf32>
      %c0_25 = arith.constant 0 : index
      %c0_26 = arith.constant 0 : index
      %29 = vector.load %arg11[%c0_25, %c0_26] : memref<128x256xf32, #tpu.memory_space<vmem>>, vector<128x256xf32>
      tpu.vector_store %arg11[%c0_25, %c0_26], %28 {strides = array<i32>} : memref<128x256xf32, #tpu.memory_space<vmem>>, vector<128x256xf32>,
    } else {
    }
    %c0 = arith.constant 0 : index
    %c0_2 = arith.constant 0 : index
    %c0_3 = arith.constant 0 : index
    %5 = vector.load %arg5[%c0, %c0_2, %c0_3] : memref<1x128x40xf32, #tpu.memory_space<vmem>>, vector<1x128x40xf32>
    %6 = vector.shape_cast %5 : vector<1x128x40xf32> to vector<128x40xf32>
    %c0_4 = arith.constant 0 : index
    %c0_5 = arith.constant 0 : index
    %c0_6 = arith.constant 0 : index
    %7 = vector.load %arg7[%c0_4, %c0_5, %c0_6] : memref<1x40x256xf32, #tpu.memory_space<vmem>>, vector<1x40x256xf32>
    %8 = vector.shape_cast %7 : vector<1x40x256xf32> to vector<40x256xf32>
    %cst = arith.constant dense<0.000000e+00> : vector<128x256xf32>
    %9 = tpu.matmul %6, %8, %cst {dimension_numbers = #tpu.dot_dimension_numbers<[1], [0], [0], [1], [0, 0, 1, 1], [], []>} : vector<128x40xf32>, vector<40x256xf32>, vector<128x256xf32> -> vector<128x256xf32>
    %c0_7 = arith.constant 0 : index
    %c0_8 = arith.constant 0 : index
    %10 = vector.load %arg11[%c0_7, %c0_8] : memref<128x256xf32, #tpu.memory_space<vmem>>, vector<128x256xf32>
    %c0_9 = arith.constant 0 : index
    %c0_10 = arith.constant 0 : index
    %c0_11 = arith.constant 0 : index
    %11 = vector.load %arg6[%c0_9, %c0_10, %c0_11] : memref<1x128x128xbf16, #tpu.memory_space<vmem>>, vector<1x128x128xbf16>
    %12 = vector.shape_cast %11 : vector<1x128x128xbf16> to vector<128x128xbf16>
    %13 = arith.truncf %9 : vector<128x256xf32> to vector<128x256xbf16>
    %cst_12 = arith.constant dense<0.000000e+00> : vector<128x256xf32>
    %14 = tpu.matmul %12, %13, %cst_12 {dimension_numbers = #tpu.dot_dimension_numbers<[1], [0], [0], [1], [0, 0, 1, 1], [], []>} : vector<128x128xbf16>, vector<128x256xbf16>, vector<128x256xf32> -> vector<128x256xf32>
    %15 = arith.addf %10, %14 : vector<128x256xf32>
    %c0_13 = arith.constant 0 : index
    %c0_14 = arith.constant 0 : index
    %16 = vector.load %arg11[%c0_13, %c0_14] : memref<128x256xf32, #tpu.memory_space<vmem>>, vector<128x256xf32>
    tpu.vector_store %arg11[%c0_13, %c0_14], %15 {strides = array<i32>} : memref<128x256xf32, #tpu.memory_space<vmem>>, vector<128x256xf32>,
    %c2_i32 = arith.constant 2 : i32
    %17 = arith.cmpi eq, %arg2, %c2_i32 : i32
    %c0_i32_15 = arith.constant 0 : i32
    %18 = arith.cmpi eq, %arg3, %c0_i32_15 : i32
    %19 = arith.andi %17, %18 : i1
    %20 = arith.extui %19 : i1 to i32
    %c0_i32_16 = arith.constant 0 : i32
    %21 = arith.cmpi ne, %20, %c0_i32_16 : i32
    scf.if %21 {
      %c0_17 = arith.constant 0 : index
      %c0_18 = arith.constant 0 : index
      %22 = vector.load %arg11[%c0_17, %c0_18] : memref<128x256xf32, #tpu.memory_space<vmem>>, vector<128x32xf32>
      %c0_19 = arith.constant 0 : index
      %c32 = arith.constant 32 : index
      %23 = vector.load %arg11[%c0_19, %c32] : memref<128x256xf32, #tpu.memory_space<vmem>>, vector<128x32xf32>
      %c0_20 = arith.constant 0 : index
      %c64 = arith.constant 64 : index
      %24 = vector.load %arg11[%c0_20, %c64] : memref<128x256xf32, #tpu.memory_space<vmem>>, vector<128x32xf32>
      %c0_21 = arith.constant 0 : index
      %c128 = arith.constant 128 : index
      %25 = vector.load %arg11[%c0_21, %c128] : memref<128x256xf32, #tpu.memory_space<vmem>>, vector<128x32xf32>
      %c0_22 = arith.constant 0 : index
      %c160 = arith.constant 160 : index
      %26 = vector.load %arg11[%c0_22, %c160] : memref<128x256xf32, #tpu.memory_space<vmem>>, vector<128x32xf32>
      %c0_23 = arith.constant 0 : index
      %c192 = arith.constant 192 : index
      %27 = vector.load %arg11[%c0_23, %c192] : memref<128x256xf32, #tpu.memory_space<vmem>>, vector<128x32xf32>
      %c0_24 = arith.constant 0 : index
      %c0_25 = arith.constant 0 : index
      %c0_26 = arith.constant 0 : index
      %28 = vector.load %arg4[%c0_24, %c0_25, %c0_26] : memref<1x128x40xf32, #tpu.memory_space<vmem>>, vector<1x128x32xf32>
      %29 = vector.shape_cast %28 : vector<1x128x32xf32> to vector<128x32xf32>
      %30 = arith.addf %22, %25 : vector<128x32xf32>
      %31 = arith.negf %30 : vector<128x32xf32>
      %32 = math.exp %31 : vector<128x32xf32>
      %cst_27 = arith.constant 1.000000e+00 : f32
      %33 = vector.broadcast %cst_27 : f32 to vector<128x32xf32>
      %34 = arith.addf %33, %32 : vector<128x32xf32>
      %35 = arith.divf %33, %34 : vector<128x32xf32>
      %36 = arith.addf %23, %26 : vector<128x32xf32>
      %37 = arith.negf %36 : vector<128x32xf32>
      %38 = math.exp %37 : vector<128x32xf32>
      %cst_28 = arith.constant 1.000000e+00 : f32
      %39 = vector.broadcast %cst_28 : f32 to vector<128x32xf32>
      %40 = arith.addf %39, %38 : vector<128x32xf32>
      %41 = arith.divf %39, %40 : vector<128x32xf32>
      %42 = arith.mulf %35, %27 : vector<128x32xf32>
      %43 = arith.addf %24, %42 : vector<128x32xf32>
      %44 = math.tanh %43 : vector<128x32xf32>
      %cst_29 = arith.constant 1.000000e+00 : f32
      %45 = vector.broadcast %cst_29 : f32 to vector<128x32xf32>
      %46 = arith.subf %45, %41 : vector<128x32xf32>
      %47 = arith.mulf %46, %44 : vector<128x32xf32>
      %48 = arith.mulf %41, %29 : vector<128x32xf32>
      %49 = arith.addf %47, %48 : vector<128x32xf32>
      %c0_30 = arith.constant 0 : index
      %c0_31 = arith.constant 0 : index
      %c0_32 = arith.constant 0 : index
      %50 = vector.load %arg10[%c0_30, %c0_31, %c0_32] : memref<1x128x32xf32, #tpu.memory_space<vmem>>, vector<1x128x32xf32>
      %51 = vector.shape_cast %50 : vector<1x128x32xf32> to vector<128x32xf32>
      %52 = vector.shape_cast %49 : vector<128x32xf32> to vector<1x128x32xf32>
      tpu.vector_store %arg10[%c0_30, %c0_31, %c0_32], %52 {strides = array<i32>} : memref<1x128x32xf32, #tpu.memory_space<vmem>>, vector<1x128x32xf32>,
    } else {
    }
    return
  }
  func.func @transform_0(%arg0: i32, %arg1: i32, %arg2: i32, %arg3: i32) -> (i32, i32, i32) {
    %c0_i32 = arith.constant 0 : i32
    %c0_i32_0 = arith.constant 0 : i32
    return %arg0, %arg1, %c0_i32 : i32, i32, i32
  }
  func.func @transform_1(%arg0: i32, %arg1: i32, %arg2: i32, %arg3: i32) -> (i32, i32, i32) {
    %c0_i32 = arith.constant 0 : i32
    %c0_i32_0 = arith.constant 0 : i32
    return %arg0, %arg3, %c0_i32 : i32, i32, i32
  }
  func.func @transform_2(%arg0: i32, %arg1: i32, %arg2: i32, %arg3: i32) -> (i32, i32, i32) {
    %c0_i32 = arith.constant 0 : i32
    return %arg2, %arg1, %arg3 : i32, i32, i32
  }
  func.func @transform_3(%arg0: i32, %arg1: i32, %arg2: i32, %arg3: i32) -> (i32, i32, i32) {
    %c0_i32 = arith.constant 0 : i32
    %c0_i32_0 = arith.constant 0 : i32
    %c0_i32_1 = arith.constant 0 : i32
    return %arg2, %c0_i32, %c0_i32_0 : i32, i32, i32
  }
  func.func @transform_4(%arg0: i32, %arg1: i32, %arg2: i32, %arg3: i32) -> (i32, i32) {
    %c0_i32 = arith.constant 0 : i32
    %c0_i32_0 = arith.constant 0 : i32
    %c0_i32_1 = arith.constant 0 : i32
    return %c0_i32, %c0_i32_0 : i32, i32
  }
  func.func @transform_5(%arg0: i32, %arg1: i32, %arg2: i32, %arg3: i32) -> (i32, i32) {
    %c0_i32 = arith.constant 0 : i32
    %c0_i32_0 = arith.constant 0 : i32
    %c0_i32_1 = arith.constant 0 : i32
    return %c0_i32, %c0_i32_0 : i32, i32
  }
  func.func @transform_6(%arg0: i32, %arg1: i32, %arg2: i32, %arg3: i32) -> (i32, i32, i32) {
    %c0_i32 = arith.constant 0 : i32
    %c0_i32_0 = arith.constant 0 : i32
    return %arg0, %arg1, %c0_i32 : i32, i32, i32
  }
}

</mosaic_0001>

<llo_original>
// kernel: tpu_custom_call.1
$region0: #{tpu_custom_call.1}
  #allocation0 [shape = 'u32[]', space=smem, size = 0x4, offset = 0x4, fixed_abs, tag = 'smem constant byte address 0x4 - core index']
  #allocation1 [shape = 'u32[144,128]{1,0:T(1,128)}', space=vmem, size = 0x12000, scoped, tag = 'internal scratch']
  #allocation2 [shape = 'f32[128,256]{1,0:T(8,128)}', space=vmem, size = 0x20000, scoped, tag = 'scratch operand']
  %s0 = inlined_call_operand.vmem [shape: f32[2,128,40], index: 0, kind: input, shape index: {}]
  %s1 = inlined_call_operand.vmem [shape: f32[2,128,40], index: 1, kind: input, shape index: {}]
  %s2 = inlined_call_operand.vmem [shape: bf16[3,128,128], index: 2, kind: input, shape index: {}]
  %s3 = inlined_call_operand.vmem [shape: f32[3,40,256], index: 3, kind: input, shape index: {}]
  %s4 = inlined_call_operand.vmem [shape: f32[40,256], index: 4, kind: input, shape index: {}]
  %s5 = inlined_call_operand.vmem [shape: f32[1,256], index: 5, kind: input, shape index: {}]
  %s6 = inlined_call_operand.vmem [shape: f32[2,128,32], index: 6, kind: output, shape index: {}]
  %s7 = sld [smem:[#allocation0]]
  $region65: #{tpu_custom_call.1} parent=0
    _
  %s9 = ssub.s32 1, %s7
  %s10 = scalar_select 0, %s9, %s7
  loop: start=0, step=1, limit=8
  $region2: #{tpu_custom_call.1} parent=0 // loop_pre_header
    _
  $region3: #{tpu_custom_call.1} parent=0 // loop_header
    %s12 = sphi 0, %s16
    %p13 = scmp.ge.s32.totalorder %s12, 8
    %s19 = sphi 0, %s45
    %s20 = sphi 0, %s41
    %s21 = sphi 0, %s37
    %s22 = sphi 0, %s33
    %s23 = sphi 0, %s19
    %s24 = sphi 0, %s20
    %s25 = sphi 0, %s21
    %s26 = sphi 0, %s22
    %s27 = sphi 0, %s23
    %s28 = sphi 0, %s24
    %s29 = sphi 0, %s25
    %s30 = sphi 0, %s26
    %s50 = sphi 0, %s52
    %s53 = sphi 0, %s50
    %s54 = sphi 0, %s53
    %s70 = sphi 0, %s54
    %s78 = sphi 0, %s80
    %s81 = sphi 0, %s78
    %s82 = sphi 0, %s81
    %s98 = sphi 0, %s82
    %s108 = sphi 0, %s110
    %s111 = sphi 0, %s108
    %s112 = sphi 0, %s111
    %s128 = sphi 0, %s112
    %s134 = sphi 0, %s136
    %s137 = sphi 0, %s134
    %s138 = sphi 0, %s137
    %s154 = sphi 0, %s138
    %s158 = sphi 0, %s158
    %s160 = sphi 0, %s158
    %s161 = sphi 0, %s160
    %s175 = sphi 0, %s161
    %s179 = sphi 0, %s179
    %s181 = sphi 0, %s179
    %s182 = sphi 0, %s181
    %s196 = sphi 0, %s182
    %s204 = sphi 0, %s206
    %s207 = sphi 0, %s204
    %s208 = sphi 0, %s207
    %s224 = sphi 0, %s208
  $region4: #{tpu_custom_call.1} parent=0 // loop_header_branch
    %15 = sbr.rel (%p13) target = $region8
  $region5: #{tpu_custom_call.1} parent=0 // loop_body
    %s17 = ssub.s32 %s12, 1
    %s18 = ssub.s32 %s12, 2
    %s31 = sadd.s32 1, %s22
    %p32 = scmp.ge.s32.totalorder %s31, 1
    %s33 = scalar_select %p32, 0, %s31
    %s34 = sadd.s32 1, %s21
    %s35 = scalar_select %p32, %s34, %s21
    %p36 = scmp.ge.s32.totalorder %s35, 3
    %s37 = scalar_select %p36, 0, %s35
    %s38 = sadd.s32 1, %s20
    %s39 = scalar_select %p36, %s38, %s20
    %p40 = scmp.ge.s32.totalorder %s39, 1
    %s41 = scalar_select %p40, 0, %s39
    %s42 = sadd.s32 1, %s19
    %s43 = scalar_select %p40, %s42, %s19
    %p44 = scmp.ge.s32.totalorder %s43, 2
    %s45 = scalar_select %p44, 0, %s43
    %s46 = ssub.s32 %s19, %s45
    %s47 = ssub.s32 %s20, %s41
    %s48 = sor.u32 %s46, %s47
    %p49 = scmp.eq.s32.totalorder %s48, 0
    %s51 = sadd.s32 %s50, 1
    %s52 = scalar_select %p49, %s50, %s51
    %p55 = pneg %p49
    %p56 = scmp.eq.s32.totalorder %s12, 5
    %p57 = por %p55, %p56
    %p58 = scmp.ne.s32.totalorder %s50, %s53
    %p59 = scmp.eq.s32.totalorder %s12, 0
    %p60 = por %p58, %p59
    %p61 = scmp.ne.s32.totalorder %s50, %s53
    %p62 = scmp.eq.s32.totalorder %s17, 5
    %p63 = por %p61, %p62
    %p64 = scmp.ne.s32.totalorder %s53, %s54
    %p65 = scmp.eq.s32.totalorder %s17, 0
    %p66 = por %p64, %p65
    %p67 = scmp.ne.s32.totalorder %s53, %s54
    %p68 = scmp.eq.s32.totalorder %s18, 5
    %p69 = por %p67, %p68
    %p71 = scmp.ne.s32.totalorder %s54, %s70
    %p72 = scmp.eq.s32.totalorder %s18, 0
    %p73 = por %p71, %p72
    %s74 = ssub.s32 %s19, %s45
    %s75 = ssub.s32 %s22, %s33
    %s76 = sor.u32 %s74, %s75
    %p77 = scmp.eq.s32.totalorder %s76, 0
    %s79 = sadd.s32 %s78, 1
    %s80 = scalar_select %p77, %s78, %s79
    %p83 = pneg %p77
    %p84 = scmp.eq.s32.totalorder %s12, 5
    %p85 = por %p83, %p84
    %p86 = scmp.ne.s32.totalorder %s78, %s81
    %p87 = scmp.eq.s32.totalorder %s12, 0
    %p88 = por %p86, %p87
    %p89 = scmp.ne.s32.totalorder %s78, %s81
    %p90 = scmp.eq.s32.totalorder %s17, 5
    %p91 = por %p89, %p90
    %p92 = scmp.ne.s32.totalorder %s81, %s82
    %p93 = scmp.eq.s32.totalorder %s17, 0
    %p94 = por %p92, %p93
    %p95 = scmp.ne.s32.totalorder %s81, %s82
    %p96 = scmp.eq.s32.totalorder %s18, 5
    %p97 = por %p95, %p96
    %p99 = scmp.ne.s32.totalorder %s82, %s98
    %p100 = scmp.eq.s32.totalorder %s18, 0
    %p101 = por %p99, %p100
    %s102 = ssub.s32 %s21, %s37
    %s103 = ssub.s32 %s20, %s41
    %s104 = sor.u32 %s102, %s103
    %s105 = ssub.s32 %s22, %s33
    %s106 = sor.u32 %s104, %s105
    %p107 = scmp.eq.s32.totalorder %s106, 0
    %s109 = sadd.s32 %s108, 1
    %s110 = scalar_select %p107, %s108, %s109
    %p113 = pneg %p107
    %p114 = scmp.eq.s32.totalorder %s12, 5
    %p115 = por %p113, %p114
    %p116 = scmp.ne.s32.totalorder %s108, %s111
    %p117 = scmp.eq.s32.totalorder %s12, 0
    %p118 = por %p116, %p117
    %p119 = scmp.ne.s32.totalorder %s108, %s111
    %p120 = scmp.eq.s32.totalorder %s17, 5
    %p121 = por %p119, %p120
    %p122 = scmp.ne.s32.totalorder %s111, %s112
    %p123 = scmp.eq.s32.totalorder %s17, 0
    %p124 = por %p122, %p123
    %p125 = scmp.ne.s32.totalorder %s111, %s112
    %p126 = scmp.eq.s32.totalorder %s18, 5
    %p127 = por %p125, %p126
    %p129 = scmp.ne.s32.totalorder %s112, %s128
    %p130 = scmp.eq.s32.totalorder %s18, 0
    %p131 = por %p129, %p130
    %s132 = ssub.s32 %s21, %s37
    %p133 = scmp.eq.s32.totalorder %s132, 0
    %s135 = sadd.s32 %s134, 1
    %s136 = scalar_select %p133, %s134, %s135
    %p139 = pneg %p133
    %p140 = scmp.eq.s32.totalorder %s12, 5
    %p141 = por %p139, %p140
    %p142 = scmp.ne.s32.totalorder %s134, %s137
    %p143 = scmp.eq.s32.totalorder %s12, 0
    %p144 = por %p142, %p143
    %p145 = scmp.ne.s32.totalorder %s134, %s137
    %p146 = scmp.eq.s32.totalorder %s17, 5
    %p147 = por %p145, %p146
    %p148 = scmp.ne.s32.totalorder %s137, %s138
    %p149 = scmp.eq.s32.totalorder %s17, 0
    %p150 = por %p148, %p149
    %p151 = scmp.ne.s32.totalorder %s137, %s138
    %p152 = scmp.eq.s32.totalorder %s18, 5
    %p153 = por %p151, %p152
    %p155 = scmp.ne.s32.totalorder %s138, %s154
    %p156 = scmp.eq.s32.totalorder %s18, 0
    %p157 = por %p155, %p156
    %s159 = sadd.s32 %s158, 1
    %p162 = scmp.eq.s32.totalorder %s12, 5
    %p163 = scmp.ne.s32.totalorder %s158, %s160
    %p164 = scmp.eq.s32.totalorder %s12, 0
    %p165 = por %p163, %p164
    %p166 = scmp.ne.s32.totalorder %s158, %s160
    %p167 = scmp.eq.s32.totalorder %s17, 5
    %p168 = por %p166, %p167
    %p169 = scmp.ne.s32.totalorder %s160, %s161
    %p170 = scmp.eq.s32.totalorder %s17, 0
    %p171 = por %p169, %p170
    %p172 = scmp.ne.s32.totalorder %s160, %s161
    %p173 = scmp.eq.s32.totalorder %s18, 5
    %p174 = por %p172, %p173
    %p176 = scmp.ne.s32.totalorder %s161, %s175
    %p177 = scmp.eq.s32.totalorder %s18, 0
    %p178 = por %p176, %p177
    %s180 = sadd.s32 %s179, 1
    %p183 = scmp.eq.s32.totalorder %s12, 5
    %p184 = scmp.ne.s32.totalorder %s179, %s181
    %p185 = scmp.eq.s32.totalorder %s12, 0
    %p186 = por %p184, %p185
    %p187 = scmp.ne.s32.totalorder %s179, %s181
    %p188 = scmp.eq.s32.totalorder %s17, 5
    %p189 = por %p187, %p188
    %p190 = scmp.ne.s32.totalorder %s181, %s182
    %p191 = scmp.eq.s32.totalorder %s17, 0
    %p192 = por %p190, %p191
    %p193 = scmp.ne.s32.totalorder %s181, %s182
    %p194 = scmp.eq.s32.totalorder %s18, 5
    %p195 = por %p193, %p194
    %p197 = scmp.ne.s32.totalorder %s182, %s196
    %p198 = scmp.eq.s32.totalorder %s18, 0
    %p199 = por %p197, %p198
    %s200 = ssub.s32 %s19, %s45
    %s201 = ssub.s32 %s20, %s41
    %s202 = sor.u32 %s200, %s201
    %p203 = scmp.eq.s32.totalorder %s202, 0
    %s205 = sadd.s32 %s204, 1
    %s206 = scalar_select %p203, %s204, %s205
    %p209 = pneg %p203
    %p210 = scmp.eq.s32.totalorder %s12, 5
    %p211 = por %p209, %p210
    %p212 = scmp.ne.s32.totalorder %s204, %s207
    %p213 = scmp.eq.s32.totalorder %s12, 0
    %p214 = por %p212, %p213
    %p215 = scmp.ne.s32.totalorder %s204, %s207
    %p216 = scmp.eq.s32.totalorder %s17, 5
    %p217 = por %p215, %p216
    %p218 = scmp.ne.s32.totalorder %s207, %s208
    %p219 = scmp.eq.s32.totalorder %s17, 0
    %p220 = por %p218, %p219
    %p221 = scmp.ne.s32.totalorder %s207, %s208
    %p222 = scmp.eq.s32.totalorder %s18, 5
    %p223 = por %p221, %p222
    %p225 = scmp.ne.s32.totalorder %s208, %s224
    %p226 = scmp.eq.s32.totalorder %s18, 0
    %p227 = por %p225, %p226
    %p228 = scmp.le.s32.totalorder 1, %s12
    %p229 = scmp.lt.s32.totalorder %s12, 7
    %p230 = pnand %p228, %p229
    %p231 = pneg %p230
    // Predicated region
    $region9: #{tpu_custom_call.1} parent=5 // pred_check
      _
    $region10: #{tpu_custom_call.1} parent=5 // pred_check_branch
      %233 = sbr.rel (%p230) target = $region12
    $region11: #{tpu_custom_call.1} parent=5 // pred_region
      %s234 = ssub.s32 %s12, 1
      // Predicated region
      $region13: #{tpu_custom_call.1} parent=11 // pred_check
        %p235 = pneg %p171
      $region14: #{tpu_custom_call.1} parent=11 // pred_check_branch
        %237 = sbr.rel (%p235) target = $region16
      $region15: #{tpu_custom_call.1} parent=11 // pred_region
        _
      $region16: #{tpu_custom_call.1} parent=11 // pred_fallthru
        _
      // Predicated region
      $region17: #{tpu_custom_call.1} parent=11 // pred_check
        %p238 = pneg %p192
      $region18: #{tpu_custom_call.1} parent=11 // pred_check_branch
        %240 = sbr.rel (%p238) target = $region20
      $region19: #{tpu_custom_call.1} parent=11 // pred_region
        _
      $region20: #{tpu_custom_call.1} parent=11 // pred_fallthru
        _
    $region12: #{tpu_custom_call.1} parent=5 // pred_fallthru
      _
    %p241 = scmp.lt.s32.totalorder %s12, 6
    // Predicated region
    $region21: #{tpu_custom_call.1} parent=5 // pred_check
      %p242 = pneg %p241
    $region22: #{tpu_custom_call.1} parent=5 // pred_check_branch
      %244 = sbr.rel (%p242) target = $region24
    $region23: #{tpu_custom_call.1} parent=5 // pred_region
      // Predicated region
      $region25: #{tpu_custom_call.1} parent=23 // pred_check
        %p245 = pneg %p60
      $region26: #{tpu_custom_call.1} parent=23 // pred_check_branch
        %247 = sbr.rel (%p245) target = $region28
      $region27: #{tpu_custom_call.1} parent=23 // pred_region
        %s248 = smul.u32 16, %s20
        %p249 = scmp.lt.s32.totalorder %s19, 1
        %s250 = scalar_select %p249, %s19, 1
        %p251 = scmp.lt.s32.totalorder %s248, 15
        %s252 = scalar_select %p251, %s248, 15
        %s253 = smul.addr %s250, 16
        %s254 = sadd.s32 %s252, %s253
        %s255 = smul.addr %s254, 8
        %s256 = scalar_lea.vmem %s0, %s255
        %s257 = smul.u32 16, %s20
      $region28: #{tpu_custom_call.1} parent=23 // pred_fallthru
        _
      // Predicated region
      $region29: #{tpu_custom_call.1} parent=23 // pred_check
        %p258 = pneg %p88
      $region30: #{tpu_custom_call.1} parent=23 // pred_check_branch
        %260 = sbr.rel (%p258) target = $region32
      $region31: #{tpu_custom_call.1} parent=23 // pred_region
        %s261 = smul.u32 16, %s22
        %p262 = scmp.lt.s32.totalorder %s19, 1
        %s263 = scalar_select %p262, %s19, 1
        %p264 = scmp.lt.s32.totalorder %s261, 15
        %s265 = scalar_select %p264, %s261, 15
        %s266 = smul.addr %s263, 16
        %s267 = sadd.s32 %s265, %s266
        %s268 = smul.addr %s267, 8
        %s269 = scalar_lea.vmem %s1, %s268
        %s270 = smul.u32 16, %s22
      $region32: #{tpu_custom_call.1} parent=23 // pred_fallthru
        _
      // Predicated region
      $region33: #{tpu_custom_call.1} parent=23 // pred_check
        %p271 = pneg %p118
      $region34: #{tpu_custom_call.1} parent=23 // pred_check_branch
        %273 = sbr.rel (%p271) target = $region36
      $region35: #{tpu_custom_call.1} parent=23 // pred_region
        %s274 = smul.u32 16, %s20
        %p275 = scmp.lt.s32.totalorder %s21, 2
        %s276 = scalar_select %p275, %s21, 2
        %p277 = scmp.lt.s32.totalorder %s274, 15
        %s278 = scalar_select %p277, %s274, 15
        %p279 = scmp.lt.s32.totalorder %s22, 0
        %s280 = scalar_select %p279, %s22, 0
        %s281 = sadd.s32 %s280, %s278
        %s282 = smul.addr %s276, 16
        %s283 = sadd.s32 %s281, %s282
        %s284 = smul.addr %s283, 4
        %s285 = scalar_lea.vmem %s2, %s284
        %s286 = smul.u32 16, %s20
      $region36: #{tpu_custom_call.1} parent=23 // pred_fallthru
        _
      // Predicated region
      $region37: #{tpu_custom_call.1} parent=23 // pred_check
        %p287 = pneg %p144
      $region38: #{tpu_custom_call.1} parent=23 // pred_check_branch
        %289 = sbr.rel (%p287) target = $region40
      $region39: #{tpu_custom_call.1} parent=23 // pred_region
        %p290 = scmp.lt.s32.totalorder %s21, 2
        %s291 = scalar_select %p290, %s21, 2
        %s292 = smul.addr %s291, 10
        %s293 = smul.addr %s292, 8
        %s294 = scalar_lea.vmem %s3, %s293
      $region40: #{tpu_custom_call.1} parent=23 // pred_fallthru
        _
    $region24: #{tpu_custom_call.1} parent=5 // pred_fallthru
      _
    %p295 = scmp.le.s32.totalorder 1, %s12
    %p296 = scmp.lt.s32.totalorder %s12, 7
    %p297 = pnand %p295, %p296
    %p298 = pneg %p297
    // Predicated region
    $region41: #{tpu_custom_call.1} parent=5 // pred_check
      _
    $region42: #{tpu_custom_call.1} parent=5 // pred_check_branch
      %300 = sbr.rel (%p297) target = $region44
    $region43: #{tpu_custom_call.1} parent=5 // pred_region
      %s301 = ssub.s32 %s12, 1
      %s302 = smul.u32 16, %s24
      %p303 = scmp.lt.s32.totalorder %s23, 1
      %s304 = scalar_select %p303, %s23, 1
      %p305 = scmp.lt.s32.totalorder %s302, 15
      %s306 = scalar_select %p305, %s302, 15
      %s307 = smul.addr %s304, 16
      %s308 = sadd.s32 %s306, %s307
      %s309 = smul.addr %s308, 8
      %s310 = scalar_lea.vmem %s0, %s309
      %p311 = pneg %p66
      %p312 = pneg %p63
      %s313 = smul.u32 16, %s26
      %p314 = scmp.lt.s32.totalorder %s23, 1
      %s315 = scalar_select %p314, %s23, 1
      %p316 = scmp.lt.s32.totalorder %s313, 15
      %s317 = scalar_select %p316, %s313, 15
      %s318 = smul.addr %s315, 16
      %s319 = sadd.s32 %s317, %s318
      %s320 = smul.addr %s319, 8
      %s321 = scalar_lea.vmem %s1, %s320
      %p322 = pneg %p94
      %p323 = pneg %p91
      %s324 = smul.u32 16, %s24
      %p325 = scmp.lt.s32.totalorder %s25, 2
      %s326 = scalar_select %p325, %s25, 2
      %p327 = scmp.lt.s32.totalorder %s324, 15
      %s328 = scalar_select %p327, %s324, 15
      %p329 = scmp.lt.s32.totalorder %s26, 0
      %s330 = scalar_select %p329, %s26, 0
      %s331 = sadd.s32 %s330, %s328
      %s332 = smul.addr %s326, 16
      %s333 = sadd.s32 %s331, %s332
      %s334 = smul.addr %s333, 4
      %s335 = scalar_lea.vmem %s2, %s334
      %p336 = pneg %p124
      %p337 = pneg %p121
      %p338 = scmp.lt.s32.totalorder %s25, 2
      %s339 = scalar_select %p338, %s25, 2
      %s340 = smul.addr %s339, 10
      %s341 = smul.addr %s340, 8
      %s342 = scalar_lea.vmem %s3, %s341
      %p343 = pneg %p150
      %p344 = pneg %p147
      %p345 = pneg %p171
      %p346 = pneg %p168
      %p347 = pneg %p192
      %p348 = pneg %p189
      %p349 = pneg %p220
      %p350 = pneg %p217
      %s351 = smul.u32 16, %s24
      %p352 = scmp.lt.s32.totalorder %s23, 1
      %s353 = scalar_select %p352, %s23, 1
      %p354 = scmp.lt.s32.totalorder %s351, 15
      %s355 = scalar_select %p354, %s351, 15
      %s356 = smul.addr %s353, 16
      %s357 = sadd.s32 %s355, %s356
      %s358 = smul.addr %s357, 8
      %s359 = scalar_lea.vmem %s6, %s358
      %s360 = smul.u32 16, %s24
      %p361 = scmp.lt.s32.totalorder %s23, 1
      %s362 = scalar_select %p361, %s23, 1
      %p363 = scmp.lt.s32.totalorder %s360, 15
      %s364 = scalar_select %p363, %s360, 15
      %s365 = smul.addr %s362, 16
      %s366 = sadd.s32 %s364, %s365
      %s367 = smul.addr %s366, 8
      %s368 = scalar_lea.vmem %s0, %s367
      %s369 = smul.u32 16, %s24
      %s370 = smul.u32 16, %s26
      %p371 = scmp.lt.s32.totalorder %s23, 1
      %s372 = scalar_select %p371, %s23, 1
      %p373 = scmp.lt.s32.totalorder %s370, 15
      %s374 = scalar_select %p373, %s370, 15
      %s375 = smul.addr %s372, 16
      %s376 = sadd.s32 %s374, %s375
      %s377 = smul.addr %s376, 8
      %s378 = scalar_lea.vmem %s1, %s377
      %s379 = smul.u32 16, %s26
      %s380 = smul.u32 16, %s24
      %p381 = scmp.lt.s32.totalorder %s25, 2
      %s382 = scalar_select %p381, %s25, 2
      %p383 = scmp.lt.s32.totalorder %s380, 15
      %s384 = scalar_select %p383, %s380, 15
      %p385 = scmp.lt.s32.totalorder %s26, 0
      %s386 = scalar_select %p385, %s26, 0
      %s387 = sadd.s32 %s386, %s384
      %s388 = smul.addr %s382, 16
      %s389 = sadd.s32 %s387, %s388
      %s390 = smul.addr %s389, 4
      %s391 = scalar_lea.vmem %s2, %s390
      %s392 = smul.u32 16, %s24
      %p393 = scmp.lt.s32.totalorder %s25, 2
      %s394 = scalar_select %p393, %s25, 2
      %s395 = smul.addr %s394, 10
      %s396 = smul.addr %s395, 8
      %s397 = scalar_lea.vmem %s3, %s396
      %s398 = smul.u32 16, %s24
      %p399 = scmp.lt.s32.totalorder %s23, 1
      %s400 = scalar_select %p399, %s23, 1
      %p401 = scmp.lt.s32.totalorder %s398, 15
      %s402 = scalar_select %p401, %s398, 15
      %s403 = smul.addr %s400, 16
      %s404 = sadd.s32 %s402, %s403
      %s405 = smul.addr %s404, 8
      %s406 = scalar_lea.vmem %s6, %s405
      %s407 = smul.u32 16, %s24
      %p409 = scmp.eq.s32.totalorder %s25, 0
      %p410 = scmp.eq.s32.totalorder %s26, 0
      %p411 = pnand %p409, %p410
      %p412 = pneg %p411
      // Predicated region
      $region45: #{tpu_custom_call.1} parent=43 // pred_check
        _
      $region46: #{tpu_custom_call.1} parent=43 // pred_check_branch
        %414 = sbr.rel (%p411) target = $region48
      $region47: #{tpu_custom_call.1} parent=43 // pred_region
        %v415 = vld [vmem:[%s368] sm:$0xff]
        %v416 = vld [vmem:[%s368 + $0x8] sm:$0xff]
        %v417 = vld [vmem:[%s368 + $0x10] sm:$0xff]
        %v418 = vld [vmem:[%s368 + $0x18] sm:$0xff]
        %v419 = vld [vmem:[%s368 + $0x20] sm:$0xff]
        %v420 = vld [vmem:[%s368 + $0x28] sm:$0xff]
        %v421 = vld [vmem:[%s368 + $0x30] sm:$0xff]
        %v422 = vld [vmem:[%s368 + $0x38] sm:$0xff]
        %v423 = vld [vmem:[%s368 + $0x40] sm:$0xff]
        %v424 = vld [vmem:[%s368 + $0x48] sm:$0xff]
        %v425 = vld [vmem:[%s368 + $0x50] sm:$0xff]
        %v426 = vld [vmem:[%s368 + $0x58] sm:$0xff]
        %v427 = vld [vmem:[%s368 + $0x60] sm:$0xff]
        %v428 = vld [vmem:[%s368 + $0x68] sm:$0xff]
        %v429 = vld [vmem:[%s368 + $0x70] sm:$0xff]
        %v430 = vld [vmem:[%s368 + $0x78] sm:$0xff]
        %v431 = vld [vmem:[%s4] sm:$0xff]
        %v432 = vld [vmem:[%s4 + $0x8] sm:$0xff]
        %v433 = vld [vmem:[%s4 + $0x10] sm:$0xff]
        %v434 = vld [vmem:[%s4 + $0x18] sm:$0xff]
        %v435 = vld [vmem:[%s4 + $0x20] sm:$0xff]
        %v436 = vld [vmem:[%s4 + $0x28] sm:$0xff]
        %v437 = vld [vmem:[%s4 + $0x30] sm:$0xff]
        %v438 = vld [vmem:[%s4 + $0x38] sm:$0xff]
        %v439 = vld [vmem:[%s4 + $0x40] sm:$0xff]
        %v440 = vld [vmem:[%s4 + $0x48] sm:$0xff]
        %v441 = vld [vmem:[%s5] sm:$0x3]
        %v443 = vlaneseq
        %v444 = vshrl.u32 %v443, 7
        %v445 = vsub.s32 0, %v444
        %v446 = vrot.slane %v441, %v445
        %v447 = vlaneseq
        %v448 = vshrl.u32 %v447, 7
        %v449 = vsub.s32 1, %v448
        %v450 = vrot.slane %v441, %v449
        %vm453 = vcmask 326656
        %v455 = vsel %vm453, %v415, 0
        %v458 = vsel %vm453, %v416, 0
        %v461 = vsel %vm453, %v417, 0
        %v464 = vsel %vm453, %v418, 0
        %v467 = vsel %vm453, %v419, 0
        %v470 = vsel %vm453, %v420, 0
        %v473 = vsel %vm453, %v421, 0
        %v476 = vsel %vm453, %v422, 0
        %v479 = vsel %vm453, %v423, 0
        %v482 = vsel %vm453, %v424, 0
        %v485 = vsel %vm453, %v425, 0
        %v488 = vsel %vm453, %v426, 0
        %v491 = vsel %vm453, %v427, 0
        %v494 = vsel %vm453, %v428, 0
        %v497 = vsel %vm453, %v429, 0
        %v500 = vsel %vm453, %v430, 0
        %502 = vmatprep.subr.mxu0 %v432
        %503 = vmatpush1.msra.mxu0 %v431
        %504 = vmatprep.subr.mxu0 %v434
        %505 = vmatpush1.msra.mxu0 %v433
        %506 = vmatprep.subr.mxu0 %v436
        %507 = vmatpush1.msra.mxu0 %v435
        %508 = vmatprep.subr.mxu0 %v438
        %509 = vmatpush1.msra.mxu0 %v437
        %510 = vmatprep.subr.mxu0 %v440
        %511 = vmatpush1.msra.mxu0 %v439
        %512 = vmatprep.subr.mxu0 0.0
        %513 = vmatpush1.msra.mxu0 0.0
        %514 = vmatprep.subr.mxu0 0.0
        %515 = vmatpush1.msra.mxu0 0.0
        %516 = vmatprep.subr.mxu0 0.0
        %517 = vmatpush1.msra.mxu0 0.0
        %518 = vmatprep.subr.mxu0 0.0
        %519 = vmatpush1.msra.mxu0 0.0
        %520 = vmatprep.subr.mxu0 0.0
        %521 = vmatpush1.msra.mxu0 0.0
        %522 = vmatprep.subr.mxu0 0.0
        %523 = vmatpush1.msra.mxu0 0.0
        %524 = vmatprep.subr.mxu0 0.0
        %525 = vmatpush1.msra.mxu0 0.0
        %526 = vmatprep.subr.mxu0 0.0
        %527 = vmatpush1.msra.mxu0 0.0
        %528 = vmatprep.subr.mxu0 0.0
        %529 = vmatpush1.msra.mxu0 0.0
        %530 = vmatprep.subr.mxu0 0.0
        %531 = vmatpush1.msra.mxu0 0.0
        %532 = vmatprep.subr.mxu0 0.0
        %533 = vmatpush1.msra.mxu0 0.0
        %534 = vmatprep.subr.mxu0 0.0
        %535 = vmatpush1.msra.mxu0 0.0
        %536 = vmatprep.subr.mxu0 0.0
        %537 = vmatpush1.msra.mxu0 0.0
        %538 = vmatprep.subr.mxu0 0.0
        %539 = vmatpush1.msra.mxu0 0.0
        %540 = vmatprep.subr.mxu0 0.0
        %541 = vmatpush1.msra.mxu0 0.0
        %542 = vmatprep.subr.mxu0 0.0
        %543 = vmatpush1.msra.mxu0 0.0
        %544 = vmatprep.subr.mxu0 0.0
        %545 = vmatpush1.msra.mxu0 0.0
        %546 = vmatprep.subr.mxu0 0.0
        %547 = vmatpush1.msra.mxu0 0.0
        %548 = vmatprep.subr.mxu0 0.0
        %549 = vmatpush1.msra.mxu0 0.0
        %550 = vmatprep.subr.mxu0 0.0
        %551 = vmatpush1.msra.mxu0 0.0
        %552 = vmatprep.subr.mxu0 0.0
        %553 = vmatpush1.msra.mxu0 0.0
        %554 = vmatprep.subr.mxu0 0.0
        %555 = vmatpush1.msra.mxu0 0.0
        %556 = vmatprep.subr.mxu0 0.0
        %557 = vmatpush1.msra.mxu0 0.0
        %558 = vmatprep.subr.mxu0 0.0
        %559 = vmatpush1.msra.mxu0 0.0
        %560 = vmatprep.subr.mxu0 0.0
        %561 = vmatpush1.msra.mxu0 0.0
        %562 = vmatprep.subr.mxu0 0.0
        %563 = vmatpush1.msra.mxu0 0.0
        %564 = vmatprep.subr.mxu0 0.0
        %565 = vmatpush1.msra.mxu0 0.0
        %566 = vmatprep.mubr.f32.mxu0 0.0
        %567 = vmatmul.mubr.f32.gmra.mrb[0].mxu0 %v455
        %v568 = vpop.f32.mrb[0].mxu0
        %v569 = vadd.f32 %v446, %v568
        %v570 = vpop.f32.mrb[0].mxu0
        %v571 = vadd.f32 %v450, %v570
        %572 = vmatprep.mubr.f32.mxu0 0.0
        %573 = vmatmul.mubr.f32.gmra.mrb[0].mxu0 %v458
        %v574 = vpop.f32.mrb[0].mxu0
        %v575 = vadd.f32 %v446, %v574
        %v576 = vpop.f32.mrb[0].mxu0
        %v577 = vadd.f32 %v450, %v576
        %578 = vmatprep.mubr.f32.mxu0 0.0
        %579 = vmatmul.mubr.f32.gmra.mrb[0].mxu0 %v461
        %v580 = vpop.f32.mrb[0].mxu0
        %v581 = vadd.f32 %v446, %v580
        %v582 = vpop.f32.mrb[0].mxu0
        %v583 = vadd.f32 %v450, %v582
        %584 = vmatprep.mubr.f32.mxu0 0.0
        %585 = vmatmul.mubr.f32.gmra.mrb[0].mxu0 %v464
        %v586 = vpop.f32.mrb[0].mxu0
        %v587 = vadd.f32 %v446, %v586
        %v588 = vpop.f32.mrb[0].mxu0
        %v589 = vadd.f32 %v450, %v588
        %590 = vmatprep.mubr.f32.mxu0 0.0
        %591 = vmatmul.mubr.f32.gmra.mrb[0].mxu0 %v467
        %v592 = vpop.f32.mrb[0].mxu0
        %v593 = vadd.f32 %v446, %v592
        %v594 = vpop.f32.mrb[0].mxu0
        %v595 = vadd.f32 %v450, %v594
        %596 = vmatprep.mubr.f32.mxu0 0.0
        %597 = vmatmul.mubr.f32.gmra.mrb[0].mxu0 %v470
        %v598 = vpop.f32.mrb[0].mxu0
        %v599 = vadd.f32 %v446, %v598
        %v600 = vpop.f32.mrb[0].mxu0
        %v601 = vadd.f32 %v450, %v600
        %602 = vmatprep.mubr.f32.mxu0 0.0
        %603 = vmatmul.mubr.f32.gmra.mrb[0].mxu0 %v473
        %v604 = vpop.f32.mrb[0].mxu0
        %v605 = vadd.f32 %v446, %v604
        %v606 = vpop.f32.mrb[0].mxu0
        %v607 = vadd.f32 %v450, %v606
        %608 = vmatprep.mubr.f32.mxu0 0.0
        %609 = vmatmul.mubr.f32.gmra.mrb[0].mxu0 %v476
        %v610 = vpop.f32.mrb[0].mxu0
        %v611 = vadd.f32 %v446, %v610
        %v612 = vpop.f32.mrb[0].mxu0
        %v613 = vadd.f32 %v450, %v612
        %614 = vmatprep.mubr.f32.mxu0 0.0
        %615 = vmatmul.mubr.f32.gmra.mrb[0].mxu0 %v479
        %v616 = vpop.f32.mrb[0].mxu0
        %v617 = vadd.f32 %v446, %v616
        %v618 = vpop.f32.mrb[0].mxu0
        %v619 = vadd.f32 %v450, %v618
        %620 = vmatprep.mubr.f32.mxu0 0.0
        %621 = vmatmul.mubr.f32.gmra.mrb[0].mxu0 %v482
        %v622 = vpop.f32.mrb[0].mxu0
        %v623 = vadd.f32 %v446, %v622
        %v624 = vpop.f32.mrb[0].mxu0
        %v625 = vadd.f32 %v450, %v624
        %626 = vmatprep.mubr.f32.mxu0 0.0
        %627 = vmatmul.mubr.f32.gmra.mrb[0].mxu0 %v485
        %v628 = vpop.f32.mrb[0].mxu0
        %v629 = vadd.f32 %v446, %v628
        %v630 = vpop.f32.mrb[0].mxu0
        %v631 = vadd.f32 %v450, %v630
        %632 = vmatprep.mubr.f32.mxu0 0.0
        %633 = vmatmul.mubr.f32.gmra.mrb[0].mxu0 %v488
        %v634 = vpop.f32.mrb[0].mxu0
        %v635 = vadd.f32 %v446, %v634
        %v636 = vpop.f32.mrb[0].mxu0
        %v637 = vadd.f32 %v450, %v636
        %638 = vmatprep.mubr.f32.mxu0 0.0
        %639 = vmatmul.mubr.f32.gmra.mrb[0].mxu0 %v491
        %v640 = vpop.f32.mrb[0].mxu0
        %v641 = vadd.f32 %v446, %v640
        %v642 = vpop.f32.mrb[0].mxu0
        %v643 = vadd.f32 %v450, %v642
        %644 = vmatprep.mubr.f32.mxu0 0.0
        %645 = vmatmul.mubr.f32.gmra.mrb[0].mxu0 %v494
        %v646 = vpop.f32.mrb[0].mxu0
        %v647 = vadd.f32 %v446, %v646
        %v648 = vpop.f32.mrb[0].mxu0
        %v649 = vadd.f32 %v450, %v648
        %650 = vmatprep.mubr.f32.mxu0 0.0
        %651 = vmatmul.mubr.f32.gmra.mrb[0].mxu0 %v497
        %v652 = vpop.f32.mrb[0].mxu0
        %v653 = vadd.f32 %v446, %v652
        %v654 = vpop.f32.mrb[0].mxu0
        %v655 = vadd.f32 %v450, %v654
        %656 = vmatprep.mubr.f32.mxu0 0.0
        %657 = vmatmul.mubr.f32.gmra.mrb[0].mxu0 %v500
        %v658 = vpop.f32.mrb[0].mxu0
        %v659 = vadd.f32 %v446, %v658
        %v660 = vpop.f32.mrb[0].mxu0
        %v661 = vadd.f32 %v450, %v660
        %662 = vdwg.mxu0
        %663 = vst [vmem:[#allocation2] sm:$0xff] %v569
        %664 = vst [vmem:[#allocation2 + $0x8] sm:$0xff] %v571
        %665 = vst [vmem:[#allocation2 + $0x10] sm:$0xff] %v575
        %666 = vst [vmem:[#allocation2 + $0x18] sm:$0xff] %v577
        %667 = vst [vmem:[#allocation2 + $0x20] sm:$0xff] %v581
        %668 = vst [vmem:[#allocation2 + $0x28] sm:$0xff] %v583
        %669 = vst [vmem:[#allocation2 + $0x30] sm:$0xff] %v587
        %670 = vst [vmem:[#allocation2 + $0x38] sm:$0xff] %v589
        %671 = vst [vmem:[#allocation2 + $0x40] sm:$0xff] %v593
        %672 = vst [vmem:[#allocation2 + $0x48] sm:$0xff] %v595
        %673 = vst [vmem:[#allocation2 + $0x50] sm:$0xff] %v599
        %674 = vst [vmem:[#allocation2 + $0x58] sm:$0xff] %v601
        %675 = vst [vmem:[#allocation2 + $0x60] sm:$0xff] %v605
        %676 = vst [vmem:[#allocation2 + $0x68] sm:$0xff] %v607
        %677 = vst [vmem:[#allocation2 + $0x70] sm:$0xff] %v611
        %678 = vst [vmem:[#allocation2 + $0x78] sm:$0xff] %v613
        %679 = vst [vmem:[#allocation2 + $0x80] sm:$0xff] %v617
        %680 = vst [vmem:[#allocation2 + $0x88] sm:$0xff] %v619
        %681 = vst [vmem:[#allocation2 + $0x90] sm:$0xff] %v623
        %682 = vst [vmem:[#allocation2 + $0x98] sm:$0xff] %v625
        %683 = vst [vmem:[#allocation2 + $0xa0] sm:$0xff] %v629
        %684 = vst [vmem:[#allocation2 + $0xa8] sm:$0xff] %v631
        %685 = vst [vmem:[#allocation2 + $0xb0] sm:$0xff] %v635
        %686 = vst [vmem:[#allocation2 + $0xb8] sm:$0xff] %v637
        %687 = vst [vmem:[#allocation2 + $0xc0] sm:$0xff] %v641
        %688 = vst [vmem:[#allocation2 + $0xc8] sm:$0xff] %v643
        %689 = vst [vmem:[#allocation2 + $0xd0] sm:$0xff] %v647
        %690 = vst [vmem:[#allocation2 + $0xd8] sm:$0xff] %v649
        %691 = vst [vmem:[#allocation2 + $0xe0] sm:$0xff] %v653
        %692 = vst [vmem:[#allocation2 + $0xe8] sm:$0xff] %v655
        %693 = vst [vmem:[#allocation2 + $0xf0] sm:$0xff] %v659
        %694 = vst [vmem:[#allocation2 + $0xf8] sm:$0xff] %v661
      $region48: #{tpu_custom_call.1} parent=43 // pred_fallthru
        _
      %v695 = vld [vmem:[%s378] sm:$0xff]
      %v696 = vld [vmem:[%s378 + $0x8] sm:$0xff]
      %v697 = vld [vmem:[%s378 + $0x10] sm:$0xff]
      %v698 = vld [vmem:[%s378 + $0x18] sm:$0xff]
      %v699 = vld [vmem:[%s378 + $0x20] sm:$0xff]
      %v700 = vld [vmem:[%s378 + $0x28] sm:$0xff]
      %v701 = vld [vmem:[%s378 + $0x30] sm:$0xff]
      %v702 = vld [vmem:[%s378 + $0x38] sm:$0xff]
      %v703 = vld [vmem:[%s378 + $0x40] sm:$0xff]
      %v704 = vld [vmem:[%s378 + $0x48] sm:$0xff]
      %v705 = vld [vmem:[%s378 + $0x50] sm:$0xff]
      %v706 = vld [vmem:[%s378 + $0x58] sm:$0xff]
      %v707 = vld [vmem:[%s378 + $0x60] sm:$0xff]
      %v708 = vld [vmem:[%s378 + $0x68] sm:$0xff]
      %v709 = vld [vmem:[%s378 + $0x70] sm:$0xff]
      %v710 = vld [vmem:[%s378 + $0x78] sm:$0xff]
      %v711 = vld [vmem:[%s397] sm:$0xff]
      %v712 = vld [vmem:[%s397 + $0x8] sm:$0xff]
      %v713 = vld [vmem:[%s397 + $0x10] sm:$0xff]
      %v714 = vld [vmem:[%s397 + $0x18] sm:$0xff]
      %v715 = vld [vmem:[%s397 + $0x20] sm:$0xff]
      %v716 = vld [vmem:[%s397 + $0x28] sm:$0xff]
      %v717 = vld [vmem:[%s397 + $0x30] sm:$0xff]
      %v718 = vld [vmem:[%s397 + $0x38] sm:$0xff]
      %v719 = vld [vmem:[%s397 + $0x40] sm:$0xff]
      %v720 = vld [vmem:[%s397 + $0x48] sm:$0xff]
      %vm721 = vcmask 326656
      %v723 = vsel %vm721, %v695, 0
      %v726 = vsel %vm721, %v696, 0
      %v729 = vsel %vm721, %v697, 0
      %v732 = vsel %vm721, %v698, 0
      %v735 = vsel %vm721, %v699, 0
      %v738 = vsel %vm721, %v700, 0
      %v741 = vsel %vm721, %v701, 0
      %v744 = vsel %vm721, %v702, 0
      %v747 = vsel %vm721, %v703, 0
      %v750 = vsel %vm721, %v704, 0
      %v753 = vsel %vm721, %v705, 0
      %v756 = vsel %vm721, %v706, 0
      %v759 = vsel %vm721, %v707, 0
      %v762 = vsel %vm721, %v708, 0
      %v765 = vsel %vm721, %v709, 0
      %v768 = vsel %vm721, %v710, 0
      %770 = vmatprep.subr.mxu0 %v712
      %771 = vmatpush1.msra.mxu0 %v711
      %772 = vmatprep.subr.mxu0 %v714
      %773 = vmatpush1.msra.mxu0 %v713
      %774 = vmatprep.subr.mxu0 %v716
      %775 = vmatpush1.msra.mxu0 %v715
      %776 = vmatprep.subr.mxu0 %v718
      %777 = vmatpush1.msra.mxu0 %v717
      %778 = vmatprep.subr.mxu0 %v720
      %779 = vmatpush1.msra.mxu0 %v719
      %780 = vmatprep.subr.mxu0 0.0
      %781 = vmatpush1.msra.mxu0 0.0
      %782 = vmatprep.subr.mxu0 0.0
      %783 = vmatpush1.msra.mxu0 0.0
      %784 = vmatprep.subr.mxu0 0.0
      %785 = vmatpush1.msra.mxu0 0.0
      %786 = vmatprep.subr.mxu0 0.0
      %787 = vmatpush1.msra.mxu0 0.0
      %788 = vmatprep.subr.mxu0 0.0
      %789 = vmatpush1.msra.mxu0 0.0
      %790 = vmatprep.subr.mxu0 0.0
      %791 = vmatpush1.msra.mxu0 0.0
      %792 = vmatprep.subr.mxu0 0.0
      %793 = vmatpush1.msra.mxu0 0.0
      %794 = vmatprep.subr.mxu0 0.0
      %795 = vmatpush1.msra.mxu0 0.0
      %796 = vmatprep.subr.mxu0 0.0
      %797 = vmatpush1.msra.mxu0 0.0
      %798 = vmatprep.subr.mxu0 0.0
      %799 = vmatpush1.msra.mxu0 0.0
      %800 = vmatprep.subr.mxu0 0.0
      %801 = vmatpush1.msra.mxu0 0.0
      %802 = vmatprep.subr.mxu0 0.0
      %803 = vmatpush1.msra.mxu0 0.0
      %804 = vmatprep.subr.mxu0 0.0
      %805 = vmatpush1.msra.mxu0 0.0
      %806 = vmatprep.subr.mxu0 0.0
      %807 = vmatpush1.msra.mxu0 0.0
      %808 = vmatprep.subr.mxu0 0.0
      %809 = vmatpush1.msra.mxu0 0.0
      %810 = vmatprep.subr.mxu0 0.0
      %811 = vmatpush1.msra.mxu0 0.0
      %812 = vmatprep.subr.mxu0 0.0
      %813 = vmatpush1.msra.mxu0 0.0
      %814 = vmatprep.subr.mxu0 0.0
      %815 = vmatpush1.msra.mxu0 0.0
      %816 = vmatprep.subr.mxu0 0.0
      %817 = vmatpush1.msra.mxu0 0.0
      %818 = vmatprep.subr.mxu0 0.0
      %819 = vmatpush1.msra.mxu0 0.0
      %820 = vmatprep.subr.mxu0 0.0
      %821 = vmatpush1.msra.mxu0 0.0
      %822 = vmatprep.subr.mxu0 0.0
      %823 = vmatpush1.msra.mxu0 0.0
      %824 = vmatprep.subr.mxu0 0.0
      %825 = vmatpush1.msra.mxu0 0.0
      %826 = vmatprep.subr.mxu0 0.0
      %827 = vmatpush1.msra.mxu0 0.0
      %828 = vmatprep.subr.mxu0 0.0
      %829 = vmatpush1.msra.mxu0 0.0
      %830 = vmatprep.subr.mxu0 0.0
      %831 = vmatpush1.msra.mxu0 0.0
      %832 = vmatprep.subr.mxu0 0.0
      %833 = vmatpush1.msra.mxu0 0.0
      %834 = vmatprep.mubr.f32.mxu0 0.0
      %835 = vmatmul.mubr.f32.gmra.mrb[0].mxu0 %v723
      %v836 = vpop.f32.mrb[0].mxu0
      %v837 = vadd.f32 0.0, %v836
      %v838 = vpop.f32.mrb[0].mxu0
      %v839 = vadd.f32 0.0, %v838
      %840 = vmatprep.mubr.f32.mxu0 0.0
      %841 = vmatmul.mubr.f32.gmra.mrb[0].mxu0 %v726
      %v842 = vpop.f32.mrb[0].mxu0
      %v843 = vadd.f32 0.0, %v842
      %v844 = vpop.f32.mrb[0].mxu0
      %v845 = vadd.f32 0.0, %v844
      %846 = vmatprep.mubr.f32.mxu0 0.0
      %847 = vmatmul.mubr.f32.gmra.mrb[0].mxu0 %v729
      %v848 = vpop.f32.mrb[0].mxu0
      %v849 = vadd.f32 0.0, %v848
      %v850 = vpop.f32.mrb[0].mxu0
      %v851 = vadd.f32 0.0, %v850
      %852 = vmatprep.mubr.f32.mxu0 0.0
      %853 = vmatmul.mubr.f32.gmra.mrb[0].mxu0 %v732
      %v854 = vpop.f32.mrb[0].mxu0
      %v855 = vadd.f32 0.0, %v854
      %v856 = vpop.f32.mrb[0].mxu0
      %v857 = vadd.f32 0.0, %v856
      %858 = vmatprep.mubr.f32.mxu0 0.0
      %859 = vmatmul.mubr.f32.gmra.mrb[0].mxu0 %v735
      %v860 = vpop.f32.mrb[0].mxu0
      %v861 = vadd.f32 0.0, %v860
      %v862 = vpop.f32.mrb[0].mxu0
      %v863 = vadd.f32 0.0, %v862
      %864 = vmatprep.mubr.f32.mxu0 0.0
      %865 = vmatmul.mubr.f32.gmra.mrb[0].mxu0 %v738
      %v866 = vpop.f32.mrb[0].mxu0
      %v867 = vadd.f32 0.0, %v866
      %v868 = vpop.f32.mrb[0].mxu0
      %v869 = vadd.f32 0.0, %v868
      %870 = vmatprep.mubr.f32.mxu0 0.0
      %871 = vmatmul.mubr.f32.gmra.mrb[0].mxu0 %v741
      %v872 = vpop.f32.mrb[0].mxu0
      %v873 = vadd.f32 0.0, %v872
      %v874 = vpop.f32.mrb[0].mxu0
      %v875 = vadd.f32 0.0, %v874
      %876 = vmatprep.mubr.f32.mxu0 0.0
      %877 = vmatmul.mubr.f32.gmra.mrb[0].mxu0 %v744
      %v878 = vpop.f32.mrb[0].mxu0
      %v879 = vadd.f32 0.0, %v878
      %v880 = vpop.f32.mrb[0].mxu0
      %v881 = vadd.f32 0.0, %v880
      %882 = vmatprep.mubr.f32.mxu0 0.0
      %883 = vmatmul.mubr.f32.gmra.mrb[0].mxu0 %v747
      %v884 = vpop.f32.mrb[0].mxu0
      %v885 = vadd.f32 0.0, %v884
      %v886 = vpop.f32.mrb[0].mxu0
      %v887 = vadd.f32 0.0, %v886
      %888 = vmatprep.mubr.f32.mxu0 0.0
      %889 = vmatmul.mubr.f32.gmra.mrb[0].mxu0 %v750
      %v890 = vpop.f32.mrb[0].mxu0
      %v891 = vadd.f32 0.0, %v890
      %v892 = vpop.f32.mrb[0].mxu0
      %v893 = vadd.f32 0.0, %v892
      %894 = vmatprep.mubr.f32.mxu0 0.0
      %895 = vmatmul.mubr.f32.gmra.mrb[0].mxu0 %v753
      %v896 = vpop.f32.mrb[0].mxu0
      %v897 = vadd.f32 0.0, %v896
      %v898 = vpop.f32.mrb[0].mxu0
      %v899 = vadd.f32 0.0, %v898
      %900 = vmatprep.mubr.f32.mxu0 0.0
      %901 = vmatmul.mubr.f32.gmra.mrb[0].mxu0 %v756
      %v902 = vpop.f32.mrb[0].mxu0
      %v903 = vadd.f32 0.0, %v902
      %v904 = vpop.f32.mrb[0].mxu0
      %v905 = vadd.f32 0.0, %v904
      %906 = vmatprep.mubr.f32.mxu0 0.0
      %907 = vmatmul.mubr.f32.gmra.mrb[0].mxu0 %v759
      %v908 = vpop.f32.mrb[0].mxu0
      %v909 = vadd.f32 0.0, %v908
      %v910 = vpop.f32.mrb[0].mxu0
      %v911 = vadd.f32 0.0, %v910
      %912 = vmatprep.mubr.f32.mxu0 0.0
      %913 = vmatmul.mubr.f32.gmra.mrb[0].mxu0 %v762
      %v914 = vpop.f32.mrb[0].mxu0
      %v915 = vadd.f32 0.0, %v914
      %v916 = vpop.f32.mrb[0].mxu0
      %v917 = vadd.f32 0.0, %v916
      %918 = vmatprep.mubr.f32.mxu0 0.0
      %919 = vmatmul.mubr.f32.gmra.mrb[0].mxu0 %v765
      %v920 = vpop.f32.mrb[0].mxu0
      %v921 = vadd.f32 0.0, %v920
      %v922 = vpop.f32.mrb[0].mxu0
      %v923 = vadd.f32 0.0, %v922
      %924 = vmatprep.mubr.f32.mxu0 0.0
      %925 = vmatmul.mubr.f32.gmra.mrb[0].mxu0 %v768
      %v926 = vpop.f32.mrb[0].mxu0
      %v927 = vadd.f32 0.0, %v926
      %v928 = vpop.f32.mrb[0].mxu0
      %v929 = vadd.f32 0.0, %v928
      %930 = vdwg.mxu0
      %v931 = vld [vmem:[#allocation2] sm:$0xff]
      %v932 = vld [vmem:[#allocation2 + $0x8] sm:$0xff]
      %v933 = vld [vmem:[#allocation2 + $0x10] sm:$0xff]
      %v934 = vld [vmem:[#allocation2 + $0x18] sm:$0xff]
      %v935 = vld [vmem:[#allocation2 + $0x20] sm:$0xff]
      %v936 = vld [vmem:[#allocation2 + $0x28] sm:$0xff]
      %v937 = vld [vmem:[#allocation2 + $0x30] sm:$0xff]
      %v938 = vld [vmem:[#allocation2 + $0x38] sm:$0xff]
      %v939 = vld [vmem:[#allocation2 + $0x40] sm:$0xff]
      %v940 = vld [vmem:[#allocation2 + $0x48] sm:$0xff]
      %v941 = vld [vmem:[#allocation2 + $0x50] sm:$0xff]
      %v942 = vld [vmem:[#allocation2 + $0x58] sm:$0xff]
      %v943 = vld [vmem:[#allocation2 + $0x60] sm:$0xff]
      %v944 = vld [vmem:[#allocation2 + $0x68] sm:$0xff]
      %v945 = vld [vmem:[#allocation2 + $0x70] sm:$0xff]
      %v946 = vld [vmem:[#allocation2 + $0x78] sm:$0xff]
      %v947 = vld [vmem:[#allocation2 + $0x80] sm:$0xff]
      %v948 = vld [vmem:[#allocation2 + $0x88] sm:$0xff]
      %v949 = vld [vmem:[#allocation2 + $0x90] sm:$0xff]
      %v950 = vld [vmem:[#allocation2 + $0x98] sm:$0xff]
      %v951 = vld [vmem:[#allocation2 + $0xa0] sm:$0xff]
      %v952 = vld [vmem:[#allocation2 + $0xa8] sm:$0xff]
      %v953 = vld [vmem:[#allocation2 + $0xb0] sm:$0xff]
      %v954 = vld [vmem:[#allocation2 + $0xb8] sm:$0xff]
      %v955 = vld [vmem:[#allocation2 + $0xc0] sm:$0xff]
      %v956 = vld [vmem:[#allocation2 + $0xc8] sm:$0xff]
      %v957 = vld [vmem:[#allocation2 + $0xd0] sm:$0xff]
      %v958 = vld [vmem:[#allocation2 + $0xd8] sm:$0xff]
      %v959 = vld [vmem:[#allocation2 + $0xe0] sm:$0xff]
      %v960 = vld [vmem:[#allocation2 + $0xe8] sm:$0xff]
      %v961 = vld [vmem:[#allocation2 + $0xf0] sm:$0xff]
      %v962 = vld [vmem:[#allocation2 + $0xf8] sm:$0xff]
      %v963 = vld [vmem:[%s391] sm:$0xf]
      %v964 = vld [vmem:[%s391 + $0x4] sm:$0xf]
      %v965 = vld [vmem:[%s391 + $0x8] sm:$0xf]
      %v966 = vld [vmem:[%s391 + $0xc] sm:$0xf]
      %v967 = vld [vmem:[%s391 + $0x10] sm:$0xf]
      %v968 = vld [vmem:[%s391 + $0x14] sm:$0xf]
      %v969 = vld [vmem:[%s391 + $0x18] sm:$0xf]
      %v970 = vld [vmem:[%s391 + $0x1c] sm:$0xf]
      %v971 = vld [vmem:[%s391 + $0x20] sm:$0xf]
      %v972 = vld [vmem:[%s391 + $0x24] sm:$0xf]
      %v973 = vld [vmem:[%s391 + $0x28] sm:$0xf]
      %v974 = vld [vmem:[%s391 + $0x2c] sm:$0xf]
      %v975 = vld [vmem:[%s391 + $0x30] sm:$0xf]
      %v976 = vld [vmem:[%s391 + $0x34] sm:$0xf]
      %v977 = vld [vmem:[%s391 + $0x38] sm:$0xf]
      %v978 = vld [vmem:[%s391 + $0x3c] sm:$0xf]
      %v979 = vpack.c.bf16 %v843, %v837
      %v980 = vpack.c.bf16 %v845, %v839
      %v981 = vpack.c.bf16 %v855, %v849
      %v982 = vpack.c.bf16 %v857, %v851
      %v983 = vpack.c.bf16 %v867, %v861
      %v984 = vpack.c.bf16 %v869, %v863
      %v985 = vpack.c.bf16 %v879, %v873
      %v986 = vpack.c.bf16 %v881, %v875
      %v987 = vpack.c.bf16 %v891, %v885
      %v988 = vpack.c.bf16 %v893, %v887
      %v989 = vpack.c.bf16 %v903, %v897
      %v990 = vpack.c.bf16 %v905, %v899
      %v991 = vpack.c.bf16 %v915, %v909
      %v992 = vpack.c.bf16 %v917, %v911
      %v993 = vpack.c.bf16 %v927, %v921
      %v994 = vpack.c.bf16 %v929, %v923
      %v1011 = vunpack.c.l.b16 %v963
      %v1012 = vunpack.c.l.b16 %v964
      %v1013 = vunpack.c.l.b16 %v965
      %v1014 = vunpack.c.l.b16 %v966
      %v1015 = vunpack.c.l.b16 %v967
      %v1016 = vunpack.c.l.b16 %v968
      %v1017 = vunpack.c.l.b16 %v969
      %v1018 = vunpack.c.l.b16 %v970
      %v1019 = vunpack.c.l.b16 %v971
      %v1020 = vunpack.c.l.b16 %v972
      %v1021 = vunpack.c.l.b16 %v973
      %v1022 = vunpack.c.l.b16 %v974
      %v1023 = vunpack.c.l.b16 %v975
      %v1024 = vunpack.c.l.b16 %v976
      %v1025 = vunpack.c.l.b16 %v977
      %v1026 = vunpack.c.l.b16 %v978
      %v1027 = vpack.c.b16 %v1012, %v1011
      %v1028 = vpack.c.b16 %v1014, %v1013
      %v1029 = vpack.c.b16 %v1016, %v1015
      %v1030 = vpack.c.b16 %v1018, %v1017
      %v1031 = vpack.c.b16 %v1020, %v1019
      %v1032 = vpack.c.b16 %v1022, %v1021
      %v1033 = vpack.c.b16 %v1024, %v1023
      %v1034 = vpack.c.b16 %v1026, %v1025
      %1043 = vmatprep.subr.bf16.mxu0 %v980
      %1044 = vmatpush1.bf16.msra.mxu0 %v979
      %1045 = vmatprep.subr.bf16.mxu0 %v982
      %1046 = vmatpush1.bf16.msra.mxu0 %v981
      %1047 = vmatprep.subr.bf16.mxu0 %v984
      %1048 = vmatpush1.bf16.msra.mxu0 %v983
      %1049 = vmatprep.subr.bf16.mxu0 %v986
      %1050 = vmatpush1.bf16.msra.mxu0 %v985
      %1051 = vmatprep.subr.bf16.mxu0 %v988
      %1052 = vmatpush1.bf16.msra.mxu0 %v987
      %1053 = vmatprep.subr.bf16.mxu0 %v990
      %1054 = vmatpush1.bf16.msra.mxu0 %v989
      %1055 = vmatprep.subr.bf16.mxu0 %v992
      %1056 = vmatpush1.bf16.msra.mxu0 %v991
      %1057 = vmatprep.subr.bf16.mxu0 %v994
      %1058 = vmatpush1.bf16.msra.mxu0 %v993
      %1059 = vmatprep.subr.bf16.mxu0 0
      %1060 = vmatpush1.bf16.msra.mxu0 0
      %1061 = vmatprep.subr.bf16.mxu0 0
      %1062 = vmatpush1.bf16.msra.mxu0 0
      %1063 = vmatprep.subr.bf16.mxu0 0
      %1064 = vmatpush1.bf16.msra.mxu0 0
      %1065 = vmatprep.subr.bf16.mxu0 0
      %1066 = vmatpush1.bf16.msra.mxu0 0
      %1067 = vmatprep.subr.bf16.mxu0 0
      %1068 = vmatpush1.bf16.msra.mxu0 0
      %1069 = vmatprep.subr.bf16.mxu0 0
      %1070 = vmatpush1.bf16.msra.mxu0 0
      %1071 = vmatprep.subr.bf16.mxu0 0
      %1072 = vmatpush1.bf16.msra.mxu0 0
      %1073 = vmatprep.subr.bf16.mxu0 0
      %1074 = vmatpush1.bf16.msra.mxu0 0
      %1075 = vmatprep.mubr.bf16.mxu0 0
      %1076 = vmatmul.mubr.bf16.gmra.mrb[0].mxu0 %v1027
      %v1077 = vpop.f32.mrb[0].mxu0
      %v1078 = vadd.f32 0.0, %v1077
      %v1079 = vpop.f32.mrb[0].mxu0
      %v1080 = vadd.f32 0.0, %v1079
      %v1081 = vpop.f32.mrb[0].mxu0
      %v1082 = vadd.f32 0.0, %v1081
      %v1083 = vpop.f32.mrb[0].mxu0
      %v1084 = vadd.f32 0.0, %v1083
      %1085 = vmatprep.mubr.bf16.mxu0 0
      %1086 = vmatmul.mubr.bf16.gmra.mrb[0].mxu0 %v1028
      %v1087 = vpop.f32.mrb[0].mxu0
      %v1088 = vadd.f32 0.0, %v1087
      %v1089 = vpop.f32.mrb[0].mxu0
      %v1090 = vadd.f32 0.0, %v1089
      %v1091 = vpop.f32.mrb[0].mxu0
      %v1092 = vadd.f32 0.0, %v1091
      %v1093 = vpop.f32.mrb[0].mxu0
      %v1094 = vadd.f32 0.0, %v1093
      %1095 = vmatprep.mubr.bf16.mxu0 0
      %1096 = vmatmul.mubr.bf16.gmra.mrb[0].mxu0 %v1029
      %v1097 = vpop.f32.mrb[0].mxu0
      %v1098 = vadd.f32 0.0, %v1097
      %v1099 = vpop.f32.mrb[0].mxu0
      %v1100 = vadd.f32 0.0, %v1099
      %v1101 = vpop.f32.mrb[0].mxu0
      %v1102 = vadd.f32 0.0, %v1101
      %v1103 = vpop.f32.mrb[0].mxu0
      %v1104 = vadd.f32 0.0, %v1103
      %1105 = vmatprep.mubr.bf16.mxu0 0
      %1106 = vmatmul.mubr.bf16.gmra.mrb[0].mxu0 %v1030
      %v1107 = vpop.f32.mrb[0].mxu0
      %v1108 = vadd.f32 0.0, %v1107
      %v1109 = vpop.f32.mrb[0].mxu0
      %v1110 = vadd.f32 0.0, %v1109
      %v1111 = vpop.f32.mrb[0].mxu0
      %v1112 = vadd.f32 0.0, %v1111
      %v1113 = vpop.f32.mrb[0].mxu0
      %v1114 = vadd.f32 0.0, %v1113
      %1115 = vmatprep.mubr.bf16.mxu0 0
      %1116 = vmatmul.mubr.bf16.gmra.mrb[0].mxu0 %v1031
      %v1117 = vpop.f32.mrb[0].mxu0
      %v1118 = vadd.f32 0.0, %v1117
      %v1119 = vpop.f32.mrb[0].mxu0
      %v1120 = vadd.f32 0.0, %v1119
      %v1121 = vpop.f32.mrb[0].mxu0
      %v1122 = vadd.f32 0.0, %v1121
      %v1123 = vpop.f32.mrb[0].mxu0
      %v1124 = vadd.f32 0.0, %v1123
      %1125 = vmatprep.mubr.bf16.mxu0 0
      %1126 = vmatmul.mubr.bf16.gmra.mrb[0].mxu0 %v1032
      %v1127 = vpop.f32.mrb[0].mxu0
      %v1128 = vadd.f32 0.0, %v1127
      %v1129 = vpop.f32.mrb[0].mxu0
      %v1130 = vadd.f32 0.0, %v1129
      %v1131 = vpop.f32.mrb[0].mxu0
      %v1132 = vadd.f32 0.0, %v1131
      %v1133 = vpop.f32.mrb[0].mxu0
      %v1134 = vadd.f32 0.0, %v1133
      %1135 = vmatprep.mubr.bf16.mxu0 0
      %1136 = vmatmul.mubr.bf16.gmra.mrb[0].mxu0 %v1033
      %v1137 = vpop.f32.mrb[0].mxu0
      %v1138 = vadd.f32 0.0, %v1137
      %v1139 = vpop.f32.mrb[0].mxu0
      %v1140 = vadd.f32 0.0, %v1139
      %v1141 = vpop.f32.mrb[0].mxu0
      %v1142 = vadd.f32 0.0, %v1141
      %v1143 = vpop.f32.mrb[0].mxu0
      %v1144 = vadd.f32 0.0, %v1143
      %1145 = vmatprep.mubr.bf16.mxu0 0
      %1146 = vmatmul.mubr.bf16.gmra.mrb[0].mxu0 %v1034
      %v1147 = vpop.f32.mrb[0].mxu0
      %v1148 = vadd.f32 0.0, %v1147
      %v1149 = vpop.f32.mrb[0].mxu0
      %v1150 = vadd.f32 0.0, %v1149
      %v1151 = vpop.f32.mrb[0].mxu0
      %v1152 = vadd.f32 0.0, %v1151
      %v1153 = vpop.f32.mrb[0].mxu0
      %v1154 = vadd.f32 0.0, %v1153
      %1155 = vdwg.mxu0
      %v1156 = vadd.f32 %v931, %v1078
      %v1157 = vadd.f32 %v932, %v1080
      %v1158 = vadd.f32 %v933, %v1082
      %v1159 = vadd.f32 %v934, %v1084
      %v1160 = vadd.f32 %v935, %v1088
      %v1161 = vadd.f32 %v936, %v1090
      %v1162 = vadd.f32 %v937, %v1092
      %v1163 = vadd.f32 %v938, %v1094
      %v1164 = vadd.f32 %v939, %v1098
      %v1165 = vadd.f32 %v940, %v1100
      %v1166 = vadd.f32 %v941, %v1102
      %v1167 = vadd.f32 %v942, %v1104
      %v1168 = vadd.f32 %v943, %v1108
      %v1169 = vadd.f32 %v944, %v1110
      %v1170 = vadd.f32 %v945, %v1112
      %v1171 = vadd.f32 %v946, %v1114
      %v1172 = vadd.f32 %v947, %v1118
      %v1173 = vadd.f32 %v948, %v1120
      %v1174 = vadd.f32 %v949, %v1122
      %v1175 = vadd.f32 %v950, %v1124
      %v1176 = vadd.f32 %v951, %v1128
      %v1177 = vadd.f32 %v952, %v1130
      %v1178 = vadd.f32 %v953, %v1132
      %v1179 = vadd.f32 %v954, %v1134
      %v1180 = vadd.f32 %v955, %v1138
      %v1181 = vadd.f32 %v956, %v1140
      %v1182 = vadd.f32 %v957, %v1142
      %v1183 = vadd.f32 %v958, %v1144
      %v1184 = vadd.f32 %v959, %v1148
      %v1185 = vadd.f32 %v960, %v1150
      %v1186 = vadd.f32 %v961, %v1152
      %v1187 = vadd.f32 %v962, %v1154
      %1188 = vst [vmem:[#allocation2] sm:$0xff] %v1156
      %1189 = vst [vmem:[#allocation2 + $0x8] sm:$0xff] %v1157
      %1190 = vst [vmem:[#allocation2 + $0x10] sm:$0xff] %v1158
      %1191 = vst [vmem:[#allocation2 + $0x18] sm:$0xff] %v1159
      %1192 = vst [vmem:[#allocation2 + $0x20] sm:$0xff] %v1160
      %1193 = vst [vmem:[#allocation2 + $0x28] sm:$0xff] %v1161
      %1194 = vst [vmem:[#allocation2 + $0x30] sm:$0xff] %v1162
      %1195 = vst [vmem:[#allocation2 + $0x38] sm:$0xff] %v1163
      %1196 = vst [vmem:[#allocation2 + $0x40] sm:$0xff] %v1164
      %1197 = vst [vmem:[#allocation2 + $0x48] sm:$0xff] %v1165
      %1198 = vst [vmem:[#allocation2 + $0x50] sm:$0xff] %v1166
      %1199 = vst [vmem:[#allocation2 + $0x58] sm:$0xff] %v1167
      %1200 = vst [vmem:[#allocation2 + $0x60] sm:$0xff] %v1168
      %1201 = vst [vmem:[#allocation2 + $0x68] sm:$0xff] %v1169
      %1202 = vst [vmem:[#allocation2 + $0x70] sm:$0xff] %v1170
      %1203 = vst [vmem:[#allocation2 + $0x78] sm:$0xff] %v1171
      %1204 = vst [vmem:[#allocation2 + $0x80] sm:$0xff] %v1172
      %1205 = vst [vmem:[#allocation2 + $0x88] sm:$0xff] %v1173
      %1206 = vst [vmem:[#allocation2 + $0x90] sm:$0xff] %v1174
      %1207 = vst [vmem:[#allocation2 + $0x98] sm:$0xff] %v1175
      %1208 = vst [vmem:[#allocation2 + $0xa0] sm:$0xff] %v1176
      %1209 = vst [vmem:[#allocation2 + $0xa8] sm:$0xff] %v1177
      %1210 = vst [vmem:[#allocation2 + $0xb0] sm:$0xff] %v1178
      %1211 = vst [vmem:[#allocation2 + $0xb8] sm:$0xff] %v1179
      %1212 = vst [vmem:[#allocation2 + $0xc0] sm:$0xff] %v1180
      %1213 = vst [vmem:[#allocation2 + $0xc8] sm:$0xff] %v1181
      %1214 = vst [vmem:[#allocation2 + $0xd0] sm:$0xff] %v1182
      %1215 = vst [vmem:[#allocation2 + $0xd8] sm:$0xff] %v1183
      %1216 = vst [vmem:[#allocation2 + $0xe0] sm:$0xff] %v1184
      %1217 = vst [vmem:[#allocation2 + $0xe8] sm:$0xff] %v1185
      %1218 = vst [vmem:[#allocation2 + $0xf0] sm:$0xff] %v1186
      %1219 = vst [vmem:[#allocation2 + $0xf8] sm:$0xff] %v1187
      %p1220 = scmp.eq.s32.totalorder %s25, 2
      %p1221 = pnand %p1220, %p410
      %p1222 = pneg %p1221
      // Predicated region
      $region49: #{tpu_custom_call.1} parent=43 // pred_check
        _
      $region50: #{tpu_custom_call.1} parent=43 // pred_check_branch
        %1224 = sbr.rel (%p1221) target = $region52
      $region51: #{tpu_custom_call.1} parent=43 // pred_region
        %v1225 = vld [vmem:[#allocation2] sm:$0xff]
        %v1226 = vld [vmem:[#allocation2 + $0x10] sm:$0xff]
        %v1227 = vld [vmem:[#allocation2 + $0x20] sm:$0xff]
        %v1228 = vld [vmem:[#allocation2 + $0x30] sm:$0xff]
        %v1229 = vld [vmem:[#allocation2 + $0x40] sm:$0xff]
        %v1230 = vld [vmem:[#allocation2 + $0x50] sm:$0xff]
        %v1231 = vld [vmem:[#allocation2 + $0x60] sm:$0xff]
        %v1232 = vld [vmem:[#allocation2 + $0x70] sm:$0xff]
        %v1233 = vld [vmem:[#allocation2 + $0x80] sm:$0xff]
        %v1234 = vld [vmem:[#allocation2 + $0x90] sm:$0xff]
        %v1235 = vld [vmem:[#allocation2 + $0xa0] sm:$0xff]
        %v1236 = vld [vmem:[#allocation2 + $0xb0] sm:$0xff]
        %v1237 = vld [vmem:[#allocation2 + $0xc0] sm:$0xff]
        %v1238 = vld [vmem:[#allocation2 + $0xd0] sm:$0xff]
        %v1239 = vld [vmem:[#allocation2 + $0xe0] sm:$0xff]
        %v1240 = vld [vmem:[#allocation2 + $0xf0] sm:$0xff]
        %v1241 = vld [vmem:[#allocation2 + $0x8] sm:$0xff]
        %v1242 = vld [vmem:[#allocation2 + $0x18] sm:$0xff]
        %v1243 = vld [vmem:[#allocation2 + $0x28] sm:$0xff]
        %v1244 = vld [vmem:[#allocation2 + $0x38] sm:$0xff]
        %v1245 = vld [vmem:[#allocation2 + $0x48] sm:$0xff]
        %v1246 = vld [vmem:[#allocation2 + $0x58] sm:$0xff]
        %v1247 = vld [vmem:[#allocation2 + $0x68] sm:$0xff]
        %v1248 = vld [vmem:[#allocation2 + $0x78] sm:$0xff]
        %v1249 = vld [vmem:[#allocation2 + $0x88] sm:$0xff]
        %v1250 = vld [vmem:[#allocation2 + $0x98] sm:$0xff]
        %v1251 = vld [vmem:[#allocation2 + $0xa8] sm:$0xff]
        %v1252 = vld [vmem:[#allocation2 + $0xb8] sm:$0xff]
        %v1253 = vld [vmem:[#allocation2 + $0xc8] sm:$0xff]
        %v1254 = vld [vmem:[#allocation2 + $0xd8] sm:$0xff]
        %v1255 = vld [vmem:[#allocation2 + $0xe8] sm:$0xff]
        %v1256 = vld [vmem:[#allocation2 + $0xf8] sm:$0xff]
        %v1257 = vld [vmem:[%s368] sm:$0xff]
        %v1258 = vld [vmem:[%s368 + $0x8] sm:$0xff]
        %v1259 = vld [vmem:[%s368 + $0x10] sm:$0xff]
        %v1260 = vld [vmem:[%s368 + $0x18] sm:$0xff]
        %v1261 = vld [vmem:[%s368 + $0x20] sm:$0xff]
        %v1262 = vld [vmem:[%s368 + $0x28] sm:$0xff]
        %v1263 = vld [vmem:[%s368 + $0x30] sm:$0xff]
        %v1264 = vld [vmem:[%s368 + $0x38] sm:$0xff]
        %v1265 = vld [vmem:[%s368 + $0x40] sm:$0xff]
        %v1266 = vld [vmem:[%s368 + $0x48] sm:$0xff]
        %v1267 = vld [vmem:[%s368 + $0x50] sm:$0xff]
        %v1268 = vld [vmem:[%s368 + $0x58] sm:$0xff]
        %v1269 = vld [vmem:[%s368 + $0x60] sm:$0xff]
        %v1270 = vld [vmem:[%s368 + $0x68] sm:$0xff]
        %v1271 = vld [vmem:[%s368 + $0x70] sm:$0xff]
        %v1272 = vld [vmem:[%s368 + $0x78] sm:$0xff]
        %v1273 = vadd.f32 %v1225, %v1241
        %v1274 = vadd.f32 %v1226, %v1242
        %v1275 = vadd.f32 %v1227, %v1243
        %v1276 = vadd.f32 %v1228, %v1244
        %v1277 = vadd.f32 %v1229, %v1245
        %v1278 = vadd.f32 %v1230, %v1246
        %v1279 = vadd.f32 %v1231, %v1247
        %v1280 = vadd.f32 %v1232, %v1248
        %v1281 = vadd.f32 %v1233, %v1249
        %v1282 = vadd.f32 %v1234, %v1250
        %v1283 = vadd.f32 %v1235, %v1251
        %v1284 = vadd.f32 %v1236, %v1252
        %v1285 = vadd.f32 %v1237, %v1253
        %v1286 = vadd.f32 %v1238, %v1254
        %v1287 = vadd.f32 %v1239, %v1255
        %v1288 = vadd.f32 %v1240, %v1256
        %v1289 = vxor.u32 %v1273, 2147483648
        %v1290 = vxor.u32 %v1274, 2147483648
        %v1291 = vxor.u32 %v1275, 2147483648
        %v1292 = vxor.u32 %v1276, 2147483648
        %v1293 = vxor.u32 %v1277, 2147483648
        %v1294 = vxor.u32 %v1278, 2147483648
        %v1295 = vxor.u32 %v1279, 2147483648
        %v1296 = vxor.u32 %v1280, 2147483648
        %v1297 = vxor.u32 %v1281, 2147483648
        %v1298 = vxor.u32 %v1282, 2147483648
        %v1299 = vxor.u32 %v1283, 2147483648
        %v1300 = vxor.u32 %v1284, 2147483648
        %v1301 = vxor.u32 %v1285, 2147483648
        %v1302 = vxor.u32 %v1286, 2147483648
        %v1303 = vxor.u32 %v1287, 2147483648
        %v1304 = vxor.u32 %v1288, 2147483648
        %v1305 = vmul.f32 %v1289, 1.442695
        %v1306 = vpow.pop %v1305
        %v1307 = vmul.f32 %v1290, 1.442695
        %v1308 = vpow.pop %v1307
        %v1309 = vmul.f32 %v1291, 1.442695
        %v1310 = vpow.pop %v1309
        %v1311 = vmul.f32 %v1292, 1.442695
        %v1312 = vpow.pop %v1311
        %v1313 = vmul.f32 %v1293, 1.442695
        %v1314 = vpow.pop %v1313
        %v1315 = vmul.f32 %v1294, 1.442695
        %v1316 = vpow.pop %v1315
        %v1317 = vmul.f32 %v1295, 1.442695
        %v1318 = vpow.pop %v1317
        %v1319 = vmul.f32 %v1296, 1.442695
        %v1320 = vpow.pop %v1319
        %v1321 = vmul.f32 %v1297, 1.442695
        %v1322 = vpow.pop %v1321
        %v1323 = vmul.f32 %v1298, 1.442695
        %v1324 = vpow.pop %v1323
        %v1325 = vmul.f32 %v1299, 1.442695
        %v1326 = vpow.pop %v1325
        %v1327 = vmul.f32 %v1300, 1.442695
        %v1328 = vpow.pop %v1327
        %v1329 = vmul.f32 %v1301, 1.442695
        %v1330 = vpow.pop %v1329
        %v1331 = vmul.f32 %v1302, 1.442695
        %v1332 = vpow.pop %v1331
        %v1333 = vmul.f32 %v1303, 1.442695
        %v1334 = vpow.pop %v1333
        %v1335 = vmul.f32 %v1304, 1.442695
        %v1336 = vpow.pop %v1335
        %v1337 = vadd.f32 %v1306, 1.0
        %v1338 = vadd.f32 %v1308, 1.0
        %v1339 = vadd.f32 %v1310, 1.0
        %v1340 = vadd.f32 %v1312, 1.0
        %v1341 = vadd.f32 %v1314, 1.0
        %v1342 = vadd.f32 %v1316, 1.0
        %v1343 = vadd.f32 %v1318, 1.0
        %v1344 = vadd.f32 %v1320, 1.0
        %v1345 = vadd.f32 %v1322, 1.0
        %v1346 = vadd.f32 %v1324, 1.0
        %v1347 = vadd.f32 %v1326, 1.0
        %v1348 = vadd.f32 %v1328, 1.0
        %v1349 = vadd.f32 %v1330, 1.0
        %v1350 = vadd.f32 %v1332, 1.0
        %v1351 = vadd.f32 %v1334, 1.0
        %v1352 = vadd.f32 %v1336, 1.0
        %v1353 = vrcp.pop %v1337
        %v1354 = vmul.f32 1.0, %v1353
        %v1355 = vrcp.pop %v1338
        %v1356 = vmul.f32 1.0, %v1355
        %v1357 = vrcp.pop %v1339
        %v1358 = vmul.f32 1.0, %v1357
        %v1359 = vrcp.pop %v1340
        %v1360 = vmul.f32 1.0, %v1359
        %v1361 = vrcp.pop %v1341
        %v1362 = vmul.f32 1.0, %v1361
        %v1363 = vrcp.pop %v1342
        %v1364 = vmul.f32 1.0, %v1363
        %v1365 = vrcp.pop %v1343
        %v1366 = vmul.f32 1.0, %v1365
        %v1367 = vrcp.pop %v1344
        %v1368 = vmul.f32 1.0, %v1367
        %v1369 = vrcp.pop %v1345
        %v1370 = vmul.f32 1.0, %v1369
        %v1371 = vrcp.pop %v1346
        %v1372 = vmul.f32 1.0, %v1371
        %v1373 = vrcp.pop %v1347
        %v1374 = vmul.f32 1.0, %v1373
        %v1375 = vrcp.pop %v1348
        %v1376 = vmul.f32 1.0, %v1375
        %v1377 = vrcp.pop %v1349
        %v1378 = vmul.f32 1.0, %v1377
        %v1379 = vrcp.pop %v1350
        %v1380 = vmul.f32 1.0, %v1379
        %v1381 = vrcp.pop %v1351
        %v1382 = vmul.f32 1.0, %v1381
        %v1383 = vrcp.pop %v1352
        %v1384 = vmul.f32 1.0, %v1383
        %1401 = vrot.lane.b32.xlu0 %v1241, 64
        %v1402 = vpop.permute.xlu0 %1401
        %1403 = vrot.lane.b32.xlu0 %v1242, 64
        %v1404 = vpop.permute.xlu0 %1403
        %1405 = vrot.lane.b32.xlu0 %v1243, 64
        %v1406 = vpop.permute.xlu0 %1405
        %1407 = vrot.lane.b32.xlu0 %v1244, 64
        %v1408 = vpop.permute.xlu0 %1407
        %1409 = vrot.lane.b32.xlu0 %v1245, 64
        %v1410 = vpop.permute.xlu0 %1409
        %1411 = vrot.lane.b32.xlu0 %v1246, 64
        %v1412 = vpop.permute.xlu0 %1411
        %1413 = vrot.lane.b32.xlu0 %v1247, 64
        %v1414 = vpop.permute.xlu0 %1413
        %1415 = vrot.lane.b32.xlu0 %v1248, 64
        %v1416 = vpop.permute.xlu0 %1415
        %1417 = vrot.lane.b32.xlu0 %v1249, 64
        %v1418 = vpop.permute.xlu0 %1417
        %1419 = vrot.lane.b32.xlu0 %v1250, 64
        %v1420 = vpop.permute.xlu0 %1419
        %1421 = vrot.lane.b32.xlu0 %v1251, 64
        %v1422 = vpop.permute.xlu0 %1421
        %1423 = vrot.lane.b32.xlu0 %v1252, 64
        %v1424 = vpop.permute.xlu0 %1423
        %1425 = vrot.lane.b32.xlu0 %v1253, 64
        %v1426 = vpop.permute.xlu0 %1425
        %1427 = vrot.lane.b32.xlu0 %v1254, 64
        %v1428 = vpop.permute.xlu0 %1427
        %1429 = vrot.lane.b32.xlu0 %v1255, 64
        %v1430 = vpop.permute.xlu0 %1429
        %1431 = vrot.lane.b32.xlu0 %v1256, 64
        %v1432 = vpop.permute.xlu0 %1431
        %v1449 = vmul.f32 %v1354, %v1402
        %v1450 = vmul.f32 %v1356, %v1404
        %v1451 = vmul.f32 %v1358, %v1406
        %v1452 = vmul.f32 %v1360, %v1408
        %v1453 = vmul.f32 %v1362, %v1410
        %v1454 = vmul.f32 %v1364, %v1412
        %v1455 = vmul.f32 %v1366, %v1414
        %v1456 = vmul.f32 %v1368, %v1416
        %v1457 = vmul.f32 %v1370, %v1418
        %v1458 = vmul.f32 %v1372, %v1420
        %v1459 = vmul.f32 %v1374, %v1422
        %v1460 = vmul.f32 %v1376, %v1424
        %v1461 = vmul.f32 %v1378, %v1426
        %v1462 = vmul.f32 %v1380, %v1428
        %v1463 = vmul.f32 %v1382, %v1430
        %v1464 = vmul.f32 %v1384, %v1432
        %1481 = vrot.lane.b32.xlu0 %v1449, 64
        %v1482 = vpop.permute.xlu0 %1481
        %1483 = vrot.lane.b32.xlu0 %v1450, 64
        %v1484 = vpop.permute.xlu0 %1483
        %1485 = vrot.lane.b32.xlu0 %v1451, 64
        %v1486 = vpop.permute.xlu0 %1485
        %1487 = vrot.lane.b32.xlu0 %v1452, 64
        %v1488 = vpop.permute.xlu0 %1487
        %1489 = vrot.lane.b32.xlu0 %v1453, 64
        %v1490 = vpop.permute.xlu0 %1489
        %1491 = vrot.lane.b32.xlu0 %v1454, 64
        %v1492 = vpop.permute.xlu0 %1491
        %1493 = vrot.lane.b32.xlu0 %v1455, 64
        %v1494 = vpop.permute.xlu0 %1493
        %1495 = vrot.lane.b32.xlu0 %v1456, 64
        %v1496 = vpop.permute.xlu0 %1495
        %1497 = vrot.lane.b32.xlu0 %v1457, 64
        %v1498 = vpop.permute.xlu0 %1497
        %1499 = vrot.lane.b32.xlu0 %v1458, 64
        %v1500 = vpop.permute.xlu0 %1499
        %1501 = vrot.lane.b32.xlu0 %v1459, 64
        %v1502 = vpop.permute.xlu0 %1501
        %1503 = vrot.lane.b32.xlu0 %v1460, 64
        %v1504 = vpop.permute.xlu0 %1503
        %1505 = vrot.lane.b32.xlu0 %v1461, 64
        %v1506 = vpop.permute.xlu0 %1505
        %1507 = vrot.lane.b32.xlu0 %v1462, 64
        %v1508 = vpop.permute.xlu0 %1507
        %1509 = vrot.lane.b32.xlu0 %v1463, 64
        %v1510 = vpop.permute.xlu0 %1509
        %1511 = vrot.lane.b32.xlu0 %v1464, 64
        %v1512 = vpop.permute.xlu0 %1511
        %v1529 = vadd.f32 %v1225, %v1482
        %v1530 = vadd.f32 %v1226, %v1484
        %v1531 = vadd.f32 %v1227, %v1486
        %v1532 = vadd.f32 %v1228, %v1488
        %v1533 = vadd.f32 %v1229, %v1490
        %v1534 = vadd.f32 %v1230, %v1492
        %v1535 = vadd.f32 %v1231, %v1494
        %v1536 = vadd.f32 %v1232, %v1496
        %v1537 = vadd.f32 %v1233, %v1498
        %v1538 = vadd.f32 %v1234, %v1500
        %v1539 = vadd.f32 %v1235, %v1502
        %v1540 = vadd.f32 %v1236, %v1504
        %v1541 = vadd.f32 %v1237, %v1506
        %v1542 = vadd.f32 %v1238, %v1508
        %v1543 = vadd.f32 %v1239, %v1510
        %v1544 = vadd.f32 %v1240, %v1512
        %v1545 = vtanh.pop %v1529
        %v1546 = vtanh.pop %v1530
        %v1547 = vtanh.pop %v1531
        %v1548 = vtanh.pop %v1532
        %v1549 = vtanh.pop %v1533
        %v1550 = vtanh.pop %v1534
        %v1551 = vtanh.pop %v1535
        %v1552 = vtanh.pop %v1536
        %v1553 = vtanh.pop %v1537
        %v1554 = vtanh.pop %v1538
        %v1555 = vtanh.pop %v1539
        %v1556 = vtanh.pop %v1540
        %v1557 = vtanh.pop %v1541
        %v1558 = vtanh.pop %v1542
        %v1559 = vtanh.pop %v1543
        %v1560 = vtanh.pop %v1544
        %v1561 = vsub.f32 1.0, %v1354
        %v1562 = vsub.f32 1.0, %v1356
        %v1563 = vsub.f32 1.0, %v1358
        %v1564 = vsub.f32 1.0, %v1360
        %v1565 = vsub.f32 1.0, %v1362
        %v1566 = vsub.f32 1.0, %v1364
        %v1567 = vsub.f32 1.0, %v1366
        %v1568 = vsub.f32 1.0, %v1368
        %v1569 = vsub.f32 1.0, %v1370
        %v1570 = vsub.f32 1.0, %v1372
        %v1571 = vsub.f32 1.0, %v1374
        %v1572 = vsub.f32 1.0, %v1376
        %v1573 = vsub.f32 1.0, %v1378
        %v1574 = vsub.f32 1.0, %v1380
        %v1575 = vsub.f32 1.0, %v1382
        %v1576 = vsub.f32 1.0, %v1384
        %1593 = vrot.lane.b32.xlu0 %v1545, 96
        %v1594 = vpop.permute.xlu0 %1593
        %1595 = vrot.lane.b32.xlu0 %v1546, 96
        %v1596 = vpop.permute.xlu0 %1595
        %1597 = vrot.lane.b32.xlu0 %v1547, 96
        %v1598 = vpop.permute.xlu0 %1597
        %1599 = vrot.lane.b32.xlu0 %v1548, 96
        %v1600 = vpop.permute.xlu0 %1599
        %1601 = vrot.lane.b32.xlu0 %v1549, 96
        %v1602 = vpop.permute.xlu0 %1601
        %1603 = vrot.lane.b32.xlu0 %v1550, 96
        %v1604 = vpop.permute.xlu0 %1603
        %1605 = vrot.lane.b32.xlu0 %v1551, 96
        %v1606 = vpop.permute.xlu0 %1605
        %1607 = vrot.lane.b32.xlu0 %v1552, 96
        %v1608 = vpop.permute.xlu0 %1607
        %1609 = vrot.lane.b32.xlu0 %v1553, 96
        %v1610 = vpop.permute.xlu0 %1609
        %1611 = vrot.lane.b32.xlu0 %v1554, 96
        %v1612 = vpop.permute.xlu0 %1611
        %1613 = vrot.lane.b32.xlu0 %v1555, 96
        %v1614 = vpop.permute.xlu0 %1613
        %1615 = vrot.lane.b32.xlu0 %v1556, 96
        %v1616 = vpop.permute.xlu0 %1615
        %1617 = vrot.lane.b32.xlu0 %v1557, 96
        %v1618 = vpop.permute.xlu0 %1617
        %1619 = vrot.lane.b32.xlu0 %v1558, 96
        %v1620 = vpop.permute.xlu0 %1619
        %1621 = vrot.lane.b32.xlu0 %v1559, 96
        %v1622 = vpop.permute.xlu0 %1621
        %1623 = vrot.lane.b32.xlu0 %v1560, 96
        %v1624 = vpop.permute.xlu0 %1623
        %v1641 = vmul.f32 %v1561, %v1594
        %v1642 = vmul.f32 %v1562, %v1596
        %v1643 = vmul.f32 %v1563, %v1598
        %v1644 = vmul.f32 %v1564, %v1600
        %v1645 = vmul.f32 %v1565, %v1602
        %v1646 = vmul.f32 %v1566, %v1604
        %v1647 = vmul.f32 %v1567, %v1606
        %v1648 = vmul.f32 %v1568, %v1608
        %v1649 = vmul.f32 %v1569, %v1610
        %v1650 = vmul.f32 %v1570, %v1612
        %v1651 = vmul.f32 %v1571, %v1614
        %v1652 = vmul.f32 %v1572, %v1616
        %v1653 = vmul.f32 %v1573, %v1618
        %v1654 = vmul.f32 %v1574, %v1620
        %v1655 = vmul.f32 %v1575, %v1622
        %v1656 = vmul.f32 %v1576, %v1624
        %1673 = vrot.lane.b32.xlu0 %v1257, 32
        %v1674 = vpop.permute.xlu0 %1673
        %1675 = vrot.lane.b32.xlu0 %v1258, 32
        %v1676 = vpop.permute.xlu0 %1675
        %1677 = vrot.lane.b32.xlu0 %v1259, 32
        %v1678 = vpop.permute.xlu0 %1677
        %1679 = vrot.lane.b32.xlu0 %v1260, 32
        %v1680 = vpop.permute.xlu0 %1679
        %1681 = vrot.lane.b32.xlu0 %v1261, 32
        %v1682 = vpop.permute.xlu0 %1681
        %1683 = vrot.lane.b32.xlu0 %v1262, 32
        %v1684 = vpop.permute.xlu0 %1683
        %1685 = vrot.lane.b32.xlu0 %v1263, 32
        %v1686 = vpop.permute.xlu0 %1685
        %1687 = vrot.lane.b32.xlu0 %v1264, 32
        %v1688 = vpop.permute.xlu0 %1687
        %1689 = vrot.lane.b32.xlu0 %v1265, 32
        %v1690 = vpop.permute.xlu0 %1689
        %1691 = vrot.lane.b32.xlu0 %v1266, 32
        %v1692 = vpop.permute.xlu0 %1691
        %1693 = vrot.lane.b32.xlu0 %v1267, 32
        %v1694 = vpop.permute.xlu0 %1693
        %1695 = vrot.lane.b32.xlu0 %v1268, 32
        %v1696 = vpop.permute.xlu0 %1695
        %1697 = vrot.lane.b32.xlu0 %v1269, 32
        %v1698 = vpop.permute.xlu0 %1697
        %1699 = vrot.lane.b32.xlu0 %v1270, 32
        %v1700 = vpop.permute.xlu0 %1699
        %1701 = vrot.lane.b32.xlu0 %v1271, 32
        %v1702 = vpop.permute.xlu0 %1701
        %1703 = vrot.lane.b32.xlu0 %v1272, 32
        %v1704 = vpop.permute.xlu0 %1703
        %v1721 = vmul.f32 %v1354, %v1674
        %v1722 = vmul.f32 %v1356, %v1676
        %v1723 = vmul.f32 %v1358, %v1678
        %v1724 = vmul.f32 %v1360, %v1680
        %v1725 = vmul.f32 %v1362, %v1682
        %v1726 = vmul.f32 %v1364, %v1684
        %v1727 = vmul.f32 %v1366, %v1686
        %v1728 = vmul.f32 %v1368, %v1688
        %v1729 = vmul.f32 %v1370, %v1690
        %v1730 = vmul.f32 %v1372, %v1692
        %v1731 = vmul.f32 %v1374, %v1694
        %v1732 = vmul.f32 %v1376, %v1696
        %v1733 = vmul.f32 %v1378, %v1698
        %v1734 = vmul.f32 %v1380, %v1700
        %v1735 = vmul.f32 %v1382, %v1702
        %v1736 = vmul.f32 %v1384, %v1704
        %v1737 = vadd.f32 %v1641, %v1721
        %v1738 = vadd.f32 %v1642, %v1722
        %v1739 = vadd.f32 %v1643, %v1723
        %v1740 = vadd.f32 %v1644, %v1724
        %v1741 = vadd.f32 %v1645, %v1725
        %v1742 = vadd.f32 %v1646, %v1726
        %v1743 = vadd.f32 %v1647, %v1727
        %v1744 = vadd.f32 %v1648, %v1728
        %v1745 = vadd.f32 %v1649, %v1729
        %v1746 = vadd.f32 %v1650, %v1730
        %v1747 = vadd.f32 %v1651, %v1731
        %v1748 = vadd.f32 %v1652, %v1732
        %v1749 = vadd.f32 %v1653, %v1733
        %v1750 = vadd.f32 %v1654, %v1734
        %v1751 = vadd.f32 %v1655, %v1735
        %v1752 = vadd.f32 %v1656, %v1736
        %1769 = vrot.lane.b32.xlu0 %v1737, 96
        %v1770 = vpop.permute.xlu0 %1769
        %1771 = vrot.lane.b32.xlu0 %v1738, 96
        %v1772 = vpop.permute.xlu0 %1771
        %1773 = vrot.lane.b32.xlu0 %v1739, 96
        %v1774 = vpop.permute.xlu0 %1773
        %1775 = vrot.lane.b32.xlu0 %v1740, 96
        %v1776 = vpop.permute.xlu0 %1775
        %1777 = vrot.lane.b32.xlu0 %v1741, 96
        %v1778 = vpop.permute.xlu0 %1777
        %1779 = vrot.lane.b32.xlu0 %v1742, 96
        %v1780 = vpop.permute.xlu0 %1779
        %1781 = vrot.lane.b32.xlu0 %v1743, 96
        %v1782 = vpop.permute.xlu0 %1781
        %1783 = vrot.lane.b32.xlu0 %v1744, 96
        %v1784 = vpop.permute.xlu0 %1783
        %1785 = vrot.lane.b32.xlu0 %v1745, 96
        %v1786 = vpop.permute.xlu0 %1785
        %1787 = vrot.lane.b32.xlu0 %v1746, 96
        %v1788 = vpop.permute.xlu0 %1787
        %1789 = vrot.lane.b32.xlu0 %v1747, 96
        %v1790 = vpop.permute.xlu0 %1789
        %1791 = vrot.lane.b32.xlu0 %v1748, 96
        %v1792 = vpop.permute.xlu0 %1791
        %1793 = vrot.lane.b32.xlu0 %v1749, 96
        %v1794 = vpop.permute.xlu0 %1793
        %1795 = vrot.lane.b32.xlu0 %v1750, 96
        %v1796 = vpop.permute.xlu0 %1795
        %1797 = vrot.lane.b32.xlu0 %v1751, 96
        %v1798 = vpop.permute.xlu0 %1797
        %1799 = vrot.lane.b32.xlu0 %v1752, 96
        %v1800 = vpop.permute.xlu0 %1799
        %vm1817 = vcmask 261120
        %1818 = vst.msk [vmem:[%s406] sm:$0xff] %vm1817, %v1770
        %1819 = vst.msk [vmem:[%s406 + $0x8] sm:$0xff] %vm1817, %v1772
        %1820 = vst.msk [vmem:[%s406 + $0x10] sm:$0xff] %vm1817, %v1774
        %1821 = vst.msk [vmem:[%s406 + $0x18] sm:$0xff] %vm1817, %v1776
        %1822 = vst.msk [vmem:[%s406 + $0x20] sm:$0xff] %vm1817, %v1778
        %1823 = vst.msk [vmem:[%s406 + $0x28] sm:$0xff] %vm1817, %v1780
        %1824 = vst.msk [vmem:[%s406 + $0x30] sm:$0xff] %vm1817, %v1782
        %1825 = vst.msk [vmem:[%s406 + $0x38] sm:$0xff] %vm1817, %v1784
        %1826 = vst.msk [vmem:[%s406 + $0x40] sm:$0xff] %vm1817, %v1786
        %1827 = vst.msk [vmem:[%s406 + $0x48] sm:$0xff] %vm1817, %v1788
        %1828 = vst.msk [vmem:[%s406 + $0x50] sm:$0xff] %vm1817, %v1790
        %1829 = vst.msk [vmem:[%s406 + $0x58] sm:$0xff] %vm1817, %v1792
        %1830 = vst.msk [vmem:[%s406 + $0x60] sm:$0xff] %vm1817, %v1794
        %1831 = vst.msk [vmem:[%s406 + $0x68] sm:$0xff] %vm1817, %v1796
        %1832 = vst.msk [vmem:[%s406 + $0x70] sm:$0xff] %vm1817, %v1798
        %1833 = vst.msk [vmem:[%s406 + $0x78] sm:$0xff] %vm1817, %v1800
      $region52: #{tpu_custom_call.1} parent=43 // pred_fallthru
        _
      %s1834 = smul.u32 16, %s24
      %p1835 = scmp.lt.s32.totalorder %s23, 1
      %s1836 = scalar_select %p1835, %s23, 1
      %p1837 = scmp.lt.s32.totalorder %s1834, 15
      %s1838 = scalar_select %p1837, %s1834, 15
      %s1839 = smul.addr %s1836, 16
      %s1840 = sadd.s32 %s1838, %s1839
      %s1841 = smul.addr %s1840, 8
      %s1842 = scalar_lea.vmem %s6, %s1841
      // Predicated region
      $region53: #{tpu_custom_call.1} parent=43 // pred_check
        %p1843 = pneg %p217
      $region54: #{tpu_custom_call.1} parent=43 // pred_check_branch
        %1845 = sbr.rel (%p1843) target = $region56
      $region55: #{tpu_custom_call.1} parent=43 // pred_region
        %s1846 = smul.u32 16, %s24
      $region56: #{tpu_custom_call.1} parent=43 // pred_fallthru
        _
    $region44: #{tpu_custom_call.1} parent=5 // pred_fallthru
      _
    %p1847 = scmp.le.s32.totalorder 2, %s12
    // Predicated region
    $region57: #{tpu_custom_call.1} parent=5 // pred_check
      %p1848 = pneg %p1847
    $region58: #{tpu_custom_call.1} parent=5 // pred_check_branch
      %1850 = sbr.rel (%p1848) target = $region60
    $region59: #{tpu_custom_call.1} parent=5 // pred_region
      %s1851 = ssub.s32 %s12, 2
      // Predicated region
      $region61: #{tpu_custom_call.1} parent=59 // pred_check
        %p1852 = pneg %p223
      $region62: #{tpu_custom_call.1} parent=59 // pred_check_branch
        %1854 = sbr.rel (%p1852) target = $region64
      $region63: #{tpu_custom_call.1} parent=59 // pred_region
        %s1855 = smul.u32 16, %s28
        %p1856 = scmp.lt.s32.totalorder %s27, 1
        %s1857 = scalar_select %p1856, %s27, 1
        %p1858 = scmp.lt.s32.totalorder %s1855, 15
        %s1859 = scalar_select %p1858, %s1855, 15
        %s1860 = smul.addr %s1857, 16
        %s1861 = sadd.s32 %s1859, %s1860
        %s1862 = smul.addr %s1861, 8
        %s1863 = scalar_lea.vmem %s6, %s1862
      $region64: #{tpu_custom_call.1} parent=59 // pred_fallthru
        _
    $region60: #{tpu_custom_call.1} parent=5 // pred_fallthru
      _
  $region6: #{tpu_custom_call.1} parent=0 // loop_footer
    %s16 = sadd.s32 1, %s12
  $region7: #{tpu_custom_call.1} parent=0 // loop_footer_branch
    %11 = sbr.rel target = $region3
  $region8: #{tpu_custom_call.1} parent=0 // loop_exit
    _

</llo_original>
